<compile_context>
chip_gen: v7x
topology: tpu7x:2x2x1
jax: 0.10.0
libtpu: 0.0.40
codegen_flags: <defaults>
</compile_context>

<pallas_src>
import functools

import jax
import jax.numpy as jnp
from jax import lax
from jax.experimental import pallas as pl
from jax.experimental.pallas import tpu as pltpu


def decoder_kernel(x_ref, w1_ref, b1_ref, w2_ref, b2_ref, out_ref,
                   *, H, W, Cin, Cmid, Cout):
  f32 = jnp.float32
  bf16 = jnp.bfloat16

  # ---- stage 1: Conv2d(Cin -> Cmid, 3x3, padding=1) + ReLU -----------------
  # One fused im2col matmul: concat the 9 shifted slices along the lane axis.
  x = x_ref[...]                                        # (H+2, W+2, Cin), pre-padded
  taps = [x[ky:ky + H, kx:kx + W, :] for ky in range(3) for kx in range(3)]
  patches = jnp.concatenate(taps, axis=-1).reshape(H * W, 9 * Cin)
  mid = jnp.dot(patches.astype(bf16), w1_ref[...], preferred_element_type=f32)
  mid = jnp.maximum(mid + b1_ref[...], 0.0).reshape(H, W, Cmid)   # f32

  # ---- stage 2: ConvTranspose2d(Cmid -> Cout, k=3, s=2, p=1, op=1) + ReLU --
  # Parity decomposition; all four parity planes from one block matmul against
  # w2_ref, which is the (4*Cmid, 4*Cout) block weight packed in the wrapper.
  zr = jnp.zeros((1, W, Cmid), f32)
  zc = jnp.zeros((H, 1, Cmid), f32)
  m01 = jnp.concatenate([mid[:, 1:, :], zc], axis=1)    # x[m,   n+1] (zero-padded)
  m10 = jnp.concatenate([mid[1:, :, :], zr], axis=0)    # x[m+1, n  ]
  m11 = jnp.concatenate([m10[:, 1:, :], zc], axis=1)    # x[m+1, n+1]
  xcat = jnp.concatenate([mid, m01, m10, m11], axis=-1).reshape(H * W, 4 * Cmid)

  res = jnp.dot(xcat.astype(bf16), w2_ref[...], preferred_element_type=f32)
  res = jnp.maximum(res + b2_ref[...], 0.0)             # (H*W, 4*Cout) = [ee|eo|oe|oo]

  # Output block is (H, 2, W, 2*Cout): element [h, r, w, s*Cout + c] is the final
  # pixel out[2h+r, 2w+s, c], so HBM already holds the interleaved image.
  out_ref[:, 0, :, :] = res[:, :2 * Cout].reshape(H, W, 2 * Cout)   # even rows
  out_ref[:, 1, :, :] = res[:, 2 * Cout:].reshape(H, W, 2 * Cout)   # odd rows


def decoder_block(x_nchw, params):
  """Pallas implementation of the decoder block forward. Input/output are NCHW."""
  w1, b1, w2, b2 = params                     # PyTorch-shaped parameters
  N, Cin, H, W = x_nchw.shape
  Cmid = w1.shape[0]                          # Conv2d weight: (Cmid, Cin, 3, 3)
  Cout = w2.shape[1]                          # ConvT weight:  (Cmid, Cout, 3, 3)

  # Layout glue (plain JAX): NCHW -> NHWC, spatial pad=1, weight repacking.
  x = jnp.transpose(x_nchw, (0, 2, 3, 1)).astype(jnp.float32)   # NHWC
  x_pad = jnp.pad(x, ((0, 0), (1, 1), (1, 1), (0, 0)))          # spatial pad=1

  # Stage-1 weight: (ky, kx, cin) rows x Cmid cols, bf16 for the MXU.
  w1_mat = jnp.transpose(w1, (2, 3, 1, 0)).reshape(9 * Cin, Cmid).astype(jnp.bfloat16)
  b1_row = b1.reshape(1, Cmid).astype(jnp.float32)

  # Stage-2 block weight: rows = [x00 | x01 | x10 | x11], cols = [ee | eo | oe | oo].
  w2t = jnp.transpose(w2, (2, 3, 0, 1))       # (3, 3, Cmid, Cout)

  def wt(ky, kx):
    return w2t[ky, kx]                        # (Cmid, Cout)

  Z = jnp.zeros((Cmid, Cout), w2.dtype)
  w2_block = jnp.concatenate([
      jnp.concatenate([wt(1, 1), wt(1, 2), wt(2, 1), wt(2, 2)], axis=1),  # x00
      jnp.concatenate([Z,        wt(1, 0), Z,        wt(2, 0)], axis=1),  # x01
      jnp.concatenate([Z,        Z,        wt(0, 1), wt(0, 2)], axis=1),  # x10
      jnp.concatenate([Z,        Z,        Z,        wt(0, 0)], axis=1),  # x11
  ], axis=0).astype(jnp.bfloat16)             # (4*Cmid, 4*Cout)
  b2_row = jnp.tile(b2.reshape(1, Cout), (1, 4)).astype(jnp.float32)      # (1, 4*Cout)

  kernel = functools.partial(decoder_kernel, H=H, W=W, Cin=Cin,
                             Cmid=Cmid, Cout=Cout)

  out = pl.pallas_call(
      kernel,
      out_shape=jax.ShapeDtypeStruct((N, H, 2, W, 2 * Cout), jnp.float32),
      grid=(N,),
      in_specs=[
          pl.BlockSpec((None, H + 2, W + 2, Cin), lambda b: (b, 0, 0, 0)),
          pl.BlockSpec((9 * Cin, Cmid), lambda b: (0, 0)),
          pl.BlockSpec((1, Cmid), lambda b: (0, 0)),
          pl.BlockSpec((4 * Cmid, 4 * Cout), lambda b: (0, 0)),
          pl.BlockSpec((1, 4 * Cout), lambda b: (0, 0)),
      ],
      out_specs=pl.BlockSpec((None, H, 2, W, 2 * Cout),
                             lambda b: (b, 0, 0, 0, 0)),
      compiler_params=pltpu.CompilerParams(
          dimension_semantics=("parallel",),
          vmem_limit_bytes=48 * 1024 * 1024),
  )(x_pad, w1_mat, b1_row, w2_block, b2_row)

  # Free reshape: (N, H, 2, W, 2*Cout) row-major == (N, 2H, 2W, Cout) interleaved.
  out_nhwc = out.reshape(N, 2 * H, 2 * W, Cout)
  return jnp.transpose(out_nhwc, (0, 3, 1, 2))          # back to NCHW


def reference(x, w1, b1, w2, b2):
  """Pure-JAX f32 reference (lax convs) matching the PyTorch forward."""
  y = lax.conv_general_dilated(
      x, w1, window_strides=(1, 1), padding=((1, 1), (1, 1)),
      dimension_numbers=('NCHW', 'OIHW', 'NCHW'))
  y = jnp.maximum(y + b1[None, :, None, None], 0.0)
  # ConvTranspose2d(k=3, s=2, p=1, op=1) == dilated conv with flipped kernel.
  w2f = jnp.transpose(jnp.flip(w2, (2, 3)), (1, 0, 2, 3))   # (Cout, Cmid, 3, 3)
  z = lax.conv_general_dilated(
      y, w2f, window_strides=(1, 1), padding=((1, 2), (1, 2)),
      lhs_dilation=(2, 2), dimension_numbers=('NCHW', 'OIHW', 'NCHW'))
  return jnp.maximum(z + b2[None, :, None, None], 0.0)


if __name__ == "__main__":
  N, Cin, Cmid, Cout, H, W = 2, 4, 8, 4, 16, 16
  key = jax.random.PRNGKey(0)
  k1, k2, k3, k4, k5 = jax.random.split(key, 5)
  x = jax.random.normal(k1, (N, Cin, H, W), jnp.float32)
  # Deterministic synthetic parameters (shapes per nn.Conv2d / nn.ConvTranspose2d).
  w1 = jax.random.normal(k2, (Cmid, Cin, 3, 3), jnp.float32) * 0.2
  b1 = jax.random.normal(k3, (Cmid,), jnp.float32) * 0.1
  w2 = jax.random.normal(k4, (Cmid, Cout, 3, 3), jnp.float32) * 0.2
  b2 = jax.random.normal(k5, (Cout,), jnp.float32) * 0.1

  out = decoder_block(x, (w1, b1, w2, b2))
  out = jax.block_until_ready(out)

  ref = reference(x, w1, b1, w2, b2)
  assert out.shape == (N, Cout, 2 * H, 2 * W), out.shape
  # bf16 matmul inputs (f32 accumulate) -> looser tolerance than the all-f32 path.
  assert jnp.allclose(out, ref, atol=5e-2, rtol=5e-2), "mismatch vs reference"
  print("KERNEL_OK")
</pallas_src>

<mosaic_0001>
module attributes {stable_mosaic.version = 11 : i64} {
  func.func @decoder_kernel(%arg0: i32, %arg1: memref<1x18x18x4xf32, #tpu.memory_space<vmem>>, %arg2: memref<36x8xbf16, #tpu.memory_space<vmem>>, %arg3: memref<1x8xf32, #tpu.memory_space<vmem>>, %arg4: memref<32x16xbf16, #tpu.memory_space<vmem>>, %arg5: memref<1x16xf32, #tpu.memory_space<vmem>>, %arg6: memref<1x16x2x16x8xf32, #tpu.memory_space<vmem>>) attributes {dimension_semantics = [#tpu.dimension_semantics<parallel>], iteration_bounds = array<i64: 2>, scalar_prefetch = 0 : i64, scratch_operands = 0 : i64, tpu.core_type = #tpu.core_type<tc>, window_params = [{transform_indices = @transform_0, window_bounds = array<i64: 1, 18, 18, 4>}, {pipeline_mode = #tpu.pipeline_mode<synchronous>, transform_indices = @transform_1, window_bounds = array<i64: 36, 8>}, {pipeline_mode = #tpu.pipeline_mode<synchronous>, transform_indices = @transform_2, window_bounds = array<i64: 1, 8>}, {pipeline_mode = #tpu.pipeline_mode<synchronous>, transform_indices = @transform_3, window_bounds = array<i64: 32, 16>}, {pipeline_mode = #tpu.pipeline_mode<synchronous>, transform_indices = @transform_4, window_bounds = array<i64: 1, 16>}, {transform_indices = @transform_5, window_bounds = array<i64: 1, 16, 2, 16, 8>}]} {
    %c0 = arith.constant 0 : index
    %c0_0 = arith.constant 0 : index
    %c0_1 = arith.constant 0 : index
    %c0_2 = arith.constant 0 : index
    %0 = vector.load %arg1[%c0, %c0_0, %c0_1, %c0_2] : memref<1x18x18x4xf32, #tpu.memory_space<vmem>>, vector<1x18x18x4xf32>
    %1 = vector.shape_cast %0 : vector<1x18x18x4xf32> to vector<18x18x4xf32>
    %2 = vector.extract_strided_slice %1 {offsets = [0, 0, 0], sizes = [16, 16, 4], strides = [1, 1, 1]} : vector<18x18x4xf32> to vector<16x16x4xf32>
    %3 = vector.extract_strided_slice %1 {offsets = [0, 1, 0], sizes = [16, 16, 4], strides = [1, 1, 1]} : vector<18x18x4xf32> to vector<16x16x4xf32>
    %4 = vector.extract_strided_slice %1 {offsets = [0, 2, 0], sizes = [16, 16, 4], strides = [1, 1, 1]} : vector<18x18x4xf32> to vector<16x16x4xf32>
    %5 = vector.extract_strided_slice %1 {offsets = [1, 0, 0], sizes = [16, 16, 4], strides = [1, 1, 1]} : vector<18x18x4xf32> to vector<16x16x4xf32>
    %6 = vector.extract_strided_slice %1 {offsets = [1, 1, 0], sizes = [16, 16, 4], strides = [1, 1, 1]} : vector<18x18x4xf32> to vector<16x16x4xf32>
    %7 = vector.extract_strided_slice %1 {offsets = [1, 2, 0], sizes = [16, 16, 4], strides = [1, 1, 1]} : vector<18x18x4xf32> to vector<16x16x4xf32>
    %8 = vector.extract_strided_slice %1 {offsets = [2, 0, 0], sizes = [16, 16, 4], strides = [1, 1, 1]} : vector<18x18x4xf32> to vector<16x16x4xf32>
    %9 = vector.extract_strided_slice %1 {offsets = [2, 1, 0], sizes = [16, 16, 4], strides = [1, 1, 1]} : vector<18x18x4xf32> to vector<16x16x4xf32>
    %10 = vector.extract_strided_slice %1 {offsets = [2, 2, 0], sizes = [16, 16, 4], strides = [1, 1, 1]} : vector<18x18x4xf32> to vector<16x16x4xf32>
    %11 = tpu.concatenate %2, %3, %4, %5, %6, %7, %8, %9, %10 in 2 : vector<16x16x4xf32>, vector<16x16x4xf32>, vector<16x16x4xf32>, vector<16x16x4xf32>, vector<16x16x4xf32>, vector<16x16x4xf32>, vector<16x16x4xf32>, vector<16x16x4xf32>, vector<16x16x4xf32> -> vector<16x16x36xf32>
    %12 = vector.shape_cast %11 : vector<16x16x36xf32> to vector<256x36xf32>
    %13 = arith.truncf %12 : vector<256x36xf32> to vector<256x36xbf16>
    %c0_3 = arith.constant 0 : index
    %c0_4 = arith.constant 0 : index
    %14 = vector.load %arg2[%c0_3, %c0_4] : memref<36x8xbf16, #tpu.memory_space<vmem>>, vector<36x8xbf16>
    %cst = arith.constant dense<0.000000e+00> : vector<256x8xf32>
    %15 = tpu.matmul %13, %14, %cst {dimension_numbers = #tpu.dot_dimension_numbers<[1], [0], [0], [1], [0, 0, 1, 1], [], []>} : vector<256x36xbf16>, vector<36x8xbf16>, vector<256x8xf32> -> vector<256x8xf32>
    %c0_5 = arith.constant 0 : index
    %c0_6 = arith.constant 0 : index
    %16 = vector.load %arg3[%c0_5, %c0_6] : memref<1x8xf32, #tpu.memory_space<vmem>>, vector<1x8xf32>
    %17 = vector.broadcast %16 : vector<1x8xf32> to vector<256x8xf32>
    %18 = arith.addf %15, %17 : vector<256x8xf32>
    %cst_7 = arith.constant 0.000000e+00 : f32
    %19 = vector.broadcast %cst_7 : f32 to vector<256x8xf32>
    %20 = arith.maximumf %18, %19 : vector<256x8xf32>
    %21 = vector.shape_cast %20 : vector<256x8xf32> to vector<16x16x8xf32>
    %cst_8 = arith.constant 0.000000e+00 : f32
    %22 = vector.broadcast %cst_8 : f32 to vector<1x16x8xf32>
    %cst_9 = arith.constant 0.000000e+00 : f32
    %23 = vector.broadcast %cst_9 : f32 to vector<16x1x8xf32>
    %24 = vector.extract_strided_slice %21 {offsets = [0, 1, 0], sizes = [16, 15, 8], strides = [1, 1, 1]} : vector<16x16x8xf32> to vector<16x15x8xf32>
    %25 = tpu.concatenate %24, %23 in 1 : vector<16x15x8xf32>, vector<16x1x8xf32> -> vector<16x16x8xf32>
    %26 = vector.extract_strided_slice %21 {offsets = [1, 0, 0], sizes = [15, 16, 8], strides = [1, 1, 1]} : vector<16x16x8xf32> to vector<15x16x8xf32>
    %27 = tpu.concatenate %26, %22 in 0 : vector<15x16x8xf32>, vector<1x16x8xf32> -> vector<16x16x8xf32>
    %28 = vector.extract_strided_slice %27 {offsets = [0, 1, 0], sizes = [16, 15, 8], strides = [1, 1, 1]} : vector<16x16x8xf32> to vector<16x15x8xf32>
    %29 = tpu.concatenate %28, %23 in 1 : vector<16x15x8xf32>, vector<16x1x8xf32> -> vector<16x16x8xf32>
    %30 = tpu.concatenate %21, %25, %27, %29 in 2 : vector<16x16x8xf32>, vector<16x16x8xf32>, vector<16x16x8xf32>, vector<16x16x8xf32> -> vector<16x16x32xf32>
    %31 = vector.shape_cast %30 : vector<16x16x32xf32> to vector<256x32xf32>
    %32 = arith.truncf %31 : vector<256x32xf32> to vector<256x32xbf16>
    %c0_10 = arith.constant 0 : index
    %c0_11 = arith.constant 0 : index
    %33 = vector.load %arg4[%c0_10, %c0_11] : memref<32x16xbf16, #tpu.memory_space<vmem>>, vector<32x16xbf16>
    %cst_12 = arith.constant dense<0.000000e+00> : vector<256x16xf32>
    %34 = tpu.matmul %32, %33, %cst_12 {dimension_numbers = #tpu.dot_dimension_numbers<[1], [0], [0], [1], [0, 0, 1, 1], [], []>} : vector<256x32xbf16>, vector<32x16xbf16>, vector<256x16xf32> -> vector<256x16xf32>
    %c0_13 = arith.constant 0 : index
    %c0_14 = arith.constant 0 : index
    %35 = vector.load %arg5[%c0_13, %c0_14] : memref<1x16xf32, #tpu.memory_space<vmem>>, vector<1x16xf32>
    %36 = vector.broadcast %35 : vector<1x16xf32> to vector<256x16xf32>
    %37 = arith.addf %34, %36 : vector<256x16xf32>
    %cst_15 = arith.constant 0.000000e+00 : f32
    %38 = vector.broadcast %cst_15 : f32 to vector<256x16xf32>
    %39 = arith.maximumf %37, %38 : vector<256x16xf32>
    %40 = vector.extract_strided_slice %39 {offsets = [0, 0], sizes = [256, 8], strides = [1, 1]} : vector<256x16xf32> to vector<256x8xf32>
    %41 = vector.shape_cast %40 : vector<256x8xf32> to vector<16x16x8xf32>
    %c0_16 = arith.constant 0 : index
    %c0_17 = arith.constant 0 : index
    %c0_18 = arith.constant 0 : index
    %c0_19 = arith.constant 0 : index
    %c0_20 = arith.constant 0 : index
    %42 = vector.load %arg6[%c0_16, %c0_17, %c0_18, %c0_19, %c0_20] : memref<1x16x2x16x8xf32, #tpu.memory_space<vmem>>, vector<1x16x1x16x8xf32>
    %43 = vector.shape_cast %42 : vector<1x16x1x16x8xf32> to vector<16x16x8xf32>
    %44 = vector.shape_cast %41 : vector<16x16x8xf32> to vector<1x16x1x16x8xf32>
    tpu.vector_store %arg6[%c0_16, %c0_17, %c0_18, %c0_19, %c0_20], %44 {strides = array<i32>} : memref<1x16x2x16x8xf32, #tpu.memory_space<vmem>>, vector<1x16x1x16x8xf32>,
    %45 = vector.extract_strided_slice %39 {offsets = [0, 8], sizes = [256, 8], strides = [1, 1]} : vector<256x16xf32> to vector<256x8xf32>
    %46 = vector.shape_cast %45 : vector<256x8xf32> to vector<16x16x8xf32>
    %c0_21 = arith.constant 0 : index
    %c0_22 = arith.constant 0 : index
    %c1 = arith.constant 1 : index
    %c0_23 = arith.constant 0 : index
    %c0_24 = arith.constant 0 : index
    %47 = vector.load %arg6[%c0_21, %c0_22, %c1, %c0_23, %c0_24] : memref<1x16x2x16x8xf32, #tpu.memory_space<vmem>>, vector<1x16x1x16x8xf32>
    %48 = vector.shape_cast %47 : vector<1x16x1x16x8xf32> to vector<16x16x8xf32>
    %49 = vector.shape_cast %46 : vector<16x16x8xf32> to vector<1x16x1x16x8xf32>
    tpu.vector_store %arg6[%c0_21, %c0_22, %c1, %c0_23, %c0_24], %49 {strides = array<i32>} : memref<1x16x2x16x8xf32, #tpu.memory_space<vmem>>, vector<1x16x1x16x8xf32>,
    return
  }
  func.func @transform_0(%arg0: i32) -> (i32, i32, i32, i32) {
    %c0_i32 = arith.constant 0 : i32
    %c0_i32_0 = arith.constant 0 : i32
    %c0_i32_1 = arith.constant 0 : i32
    %c0_i32_2 = arith.constant 0 : i32
    return %arg0, %c0_i32, %c0_i32_0, %c0_i32_1 : i32, i32, i32, i32
  }
  func.func @transform_1(%arg0: i32) -> (i32, i32) {
    %c0_i32 = arith.constant 0 : i32
    %c0_i32_0 = arith.constant 0 : i32
    %c0_i32_1 = arith.constant 0 : i32
    return %c0_i32, %c0_i32_0 : i32, i32
  }
  func.func @transform_2(%arg0: i32) -> (i32, i32) {
    %c0_i32 = arith.constant 0 : i32
    %c0_i32_0 = arith.constant 0 : i32
    %c0_i32_1 = arith.constant 0 : i32
    return %c0_i32, %c0_i32_0 : i32, i32
  }
  func.func @transform_3(%arg0: i32) -> (i32, i32) {
    %c0_i32 = arith.constant 0 : i32
    %c0_i32_0 = arith.constant 0 : i32
    %c0_i32_1 = arith.constant 0 : i32
    return %c0_i32, %c0_i32_0 : i32, i32
  }
  func.func @transform_4(%arg0: i32) -> (i32, i32) {
    %c0_i32 = arith.constant 0 : i32
    %c0_i32_0 = arith.constant 0 : i32
    %c0_i32_1 = arith.constant 0 : i32
    return %c0_i32, %c0_i32_0 : i32, i32
  }
  func.func @transform_5(%arg0: i32) -> (i32, i32, i32, i32, i32) {
    %c0_i32 = arith.constant 0 : i32
    %c0_i32_0 = arith.constant 0 : i32
    %c0_i32_1 = arith.constant 0 : i32
    %c0_i32_2 = arith.constant 0 : i32
    %c0_i32_3 = arith.constant 0 : i32
    return %arg0, %c0_i32, %c0_i32_0, %c0_i32_1, %c0_i32_2 : i32, i32, i32, i32, i32
  }
}

</mosaic_0001>

<llo_original>
// kernel: tpu_custom_call.1
$region0: #{tpu_custom_call.1}
  #allocation0 [shape = 'u32[]', space=smem, size = 0x4, offset = 0x4, fixed_abs, tag = 'smem constant byte address 0x4 - core index']
  #allocation1 [shape = 'u32[144,128]{1,0:T(1,128)}', space=vmem, size = 0x12000, scoped, tag = 'internal scratch']
  %s0 = inlined_call_operand.vmem [shape: f32[2,18,18,4], index: 0, kind: input, shape index: {}]
  %s1 = inlined_call_operand.vmem [shape: bf16[36,8], index: 1, kind: input, shape index: {}]
  %s2 = inlined_call_operand.vmem [shape: f32[1,8], index: 2, kind: input, shape index: {}]
  %s3 = inlined_call_operand.vmem [shape: bf16[32,16], index: 3, kind: input, shape index: {}]
  %s4 = inlined_call_operand.vmem [shape: f32[1,16], index: 4, kind: input, shape index: {}]
  %s5 = inlined_call_operand.vmem [shape: f32[2,16,2,16,8], index: 5, kind: output, shape index: {}]
  %s6 = sld [smem:[#allocation0]]
  $region53: #{tpu_custom_call.1} parent=0
    _
  %s8 = ssub.s32 1, %s6
  %s9 = scalar_select 0, %s8, %s6
  loop: start=0, step=1, limit=4
  $region2: #{tpu_custom_call.1} parent=0 // loop_pre_header
    _
  $region3: #{tpu_custom_call.1} parent=0 // loop_header
    %s11 = sphi 0, %s15
    %p12 = scmp.ge.s32.totalorder %s11, 4
    %s21 = sphi 0, %s23
    %s24 = sphi 0, %s21
    %s25 = sphi 0, %s24
    %s41 = sphi 0, %s25
    %s45 = sphi 0, %s45
    %s47 = sphi 0, %s45
    %s48 = sphi 0, %s47
    %s62 = sphi 0, %s48
    %s66 = sphi 0, %s66
    %s68 = sphi 0, %s66
    %s69 = sphi 0, %s68
    %s83 = sphi 0, %s69
    %s87 = sphi 0, %s87
    %s89 = sphi 0, %s87
    %s90 = sphi 0, %s89
    %s104 = sphi 0, %s90
    %s108 = sphi 0, %s108
    %s110 = sphi 0, %s108
    %s111 = sphi 0, %s110
    %s125 = sphi 0, %s111
    %s131 = sphi 0, %s133
    %s134 = sphi 0, %s131
    %s135 = sphi 0, %s134
    %s151 = sphi 0, %s135
  $region4: #{tpu_custom_call.1} parent=0 // loop_header_branch
    %14 = sbr.rel (%p12) target = $region8
  $region5: #{tpu_custom_call.1} parent=0 // loop_body
    %s16 = ssub.s32 %s11, 1
    %s17 = ssub.s32 %s11, 2
    %s18 = sadd.s32 %s11, 1
    %s19 = ssub.s32 %s11, %s18
    %p20 = scmp.eq.s32.totalorder %s19, 0
    %s22 = sadd.s32 %s21, 1
    %s23 = scalar_select %p20, %s21, %s22
    %p26 = pneg %p20
    %p27 = scmp.eq.s32.totalorder %s11, 1
    %p28 = por %p26, %p27
    %p29 = scmp.ne.s32.totalorder %s21, %s24
    %p30 = scmp.eq.s32.totalorder %s11, 0
    %p31 = por %p29, %p30
    %p32 = scmp.ne.s32.totalorder %s21, %s24
    %p33 = scmp.eq.s32.totalorder %s16, 1
    %p34 = por %p32, %p33
    %p35 = scmp.ne.s32.totalorder %s24, %s25
    %p36 = scmp.eq.s32.totalorder %s16, 0
    %p37 = por %p35, %p36
    %p38 = scmp.ne.s32.totalorder %s24, %s25
    %p39 = scmp.eq.s32.totalorder %s17, 1
    %p40 = por %p38, %p39
    %p42 = scmp.ne.s32.totalorder %s25, %s41
    %p43 = scmp.eq.s32.totalorder %s17, 0
    %p44 = por %p42, %p43
    %s46 = sadd.s32 %s45, 1
    %p49 = scmp.eq.s32.totalorder %s11, 1
    %p50 = scmp.ne.s32.totalorder %s45, %s47
    %p51 = scmp.eq.s32.totalorder %s11, 0
    %p52 = por %p50, %p51
    %p53 = scmp.ne.s32.totalorder %s45, %s47
    %p54 = scmp.eq.s32.totalorder %s16, 1
    %p55 = por %p53, %p54
    %p56 = scmp.ne.s32.totalorder %s47, %s48
    %p57 = scmp.eq.s32.totalorder %s16, 0
    %p58 = por %p56, %p57
    %p59 = scmp.ne.s32.totalorder %s47, %s48
    %p60 = scmp.eq.s32.totalorder %s17, 1
    %p61 = por %p59, %p60
    %p63 = scmp.ne.s32.totalorder %s48, %s62
    %p64 = scmp.eq.s32.totalorder %s17, 0
    %p65 = por %p63, %p64
    %s67 = sadd.s32 %s66, 1
    %p70 = scmp.eq.s32.totalorder %s11, 1
    %p71 = scmp.ne.s32.totalorder %s66, %s68
    %p72 = scmp.eq.s32.totalorder %s11, 0
    %p73 = por %p71, %p72
    %p74 = scmp.ne.s32.totalorder %s66, %s68
    %p75 = scmp.eq.s32.totalorder %s16, 1
    %p76 = por %p74, %p75
    %p77 = scmp.ne.s32.totalorder %s68, %s69
    %p78 = scmp.eq.s32.totalorder %s16, 0
    %p79 = por %p77, %p78
    %p80 = scmp.ne.s32.totalorder %s68, %s69
    %p81 = scmp.eq.s32.totalorder %s17, 1
    %p82 = por %p80, %p81
    %p84 = scmp.ne.s32.totalorder %s69, %s83
    %p85 = scmp.eq.s32.totalorder %s17, 0
    %p86 = por %p84, %p85
    %s88 = sadd.s32 %s87, 1
    %p91 = scmp.eq.s32.totalorder %s11, 1
    %p92 = scmp.ne.s32.totalorder %s87, %s89
    %p93 = scmp.eq.s32.totalorder %s11, 0
    %p94 = por %p92, %p93
    %p95 = scmp.ne.s32.totalorder %s87, %s89
    %p96 = scmp.eq.s32.totalorder %s16, 1
    %p97 = por %p95, %p96
    %p98 = scmp.ne.s32.totalorder %s89, %s90
    %p99 = scmp.eq.s32.totalorder %s16, 0
    %p100 = por %p98, %p99
    %p101 = scmp.ne.s32.totalorder %s89, %s90
    %p102 = scmp.eq.s32.totalorder %s17, 1
    %p103 = por %p101, %p102
    %p105 = scmp.ne.s32.totalorder %s90, %s104
    %p106 = scmp.eq.s32.totalorder %s17, 0
    %p107 = por %p105, %p106
    %s109 = sadd.s32 %s108, 1
    %p112 = scmp.eq.s32.totalorder %s11, 1
    %p113 = scmp.ne.s32.totalorder %s108, %s110
    %p114 = scmp.eq.s32.totalorder %s11, 0
    %p115 = por %p113, %p114
    %p116 = scmp.ne.s32.totalorder %s108, %s110
    %p117 = scmp.eq.s32.totalorder %s16, 1
    %p118 = por %p116, %p117
    %p119 = scmp.ne.s32.totalorder %s110, %s111
    %p120 = scmp.eq.s32.totalorder %s16, 0
    %p121 = por %p119, %p120
    %p122 = scmp.ne.s32.totalorder %s110, %s111
    %p123 = scmp.eq.s32.totalorder %s17, 1
    %p124 = por %p122, %p123
    %p126 = scmp.ne.s32.totalorder %s111, %s125
    %p127 = scmp.eq.s32.totalorder %s17, 0
    %p128 = por %p126, %p127
    %s129 = ssub.s32 %s11, %s18
    %p130 = scmp.eq.s32.totalorder %s129, 0
    %s132 = sadd.s32 %s131, 1
    %s133 = scalar_select %p130, %s131, %s132
    %p136 = pneg %p130
    %p137 = scmp.eq.s32.totalorder %s11, 1
    %p138 = por %p136, %p137
    %p139 = scmp.ne.s32.totalorder %s131, %s134
    %p140 = scmp.eq.s32.totalorder %s11, 0
    %p141 = por %p139, %p140
    %p142 = scmp.ne.s32.totalorder %s131, %s134
    %p143 = scmp.eq.s32.totalorder %s16, 1
    %p144 = por %p142, %p143
    %p145 = scmp.ne.s32.totalorder %s134, %s135
    %p146 = scmp.eq.s32.totalorder %s16, 0
    %p147 = por %p145, %p146
    %p148 = scmp.ne.s32.totalorder %s134, %s135
    %p149 = scmp.eq.s32.totalorder %s17, 1
    %p150 = por %p148, %p149
    %p152 = scmp.ne.s32.totalorder %s135, %s151
    %p153 = scmp.eq.s32.totalorder %s17, 0
    %p154 = por %p152, %p153
    %p155 = scmp.le.s32.totalorder 1, %s11
    %p156 = scmp.lt.s32.totalorder %s11, 3
    %p157 = pnand %p155, %p156
    %p158 = pneg %p157
    // Predicated region
    $region9: #{tpu_custom_call.1} parent=5 // pred_check
      _
    $region10: #{tpu_custom_call.1} parent=5 // pred_check_branch
      %160 = sbr.rel (%p157) target = $region12
    $region11: #{tpu_custom_call.1} parent=5 // pred_region
      %s161 = ssub.s32 %s11, 1
      // Predicated region
      $region13: #{tpu_custom_call.1} parent=11 // pred_check
        %p162 = pneg %p58
      $region14: #{tpu_custom_call.1} parent=11 // pred_check_branch
        %164 = sbr.rel (%p162) target = $region16
      $region15: #{tpu_custom_call.1} parent=11 // pred_region
        _
      $region16: #{tpu_custom_call.1} parent=11 // pred_fallthru
        _
      // Predicated region
      $region17: #{tpu_custom_call.1} parent=11 // pred_check
        %p165 = pneg %p79
      $region18: #{tpu_custom_call.1} parent=11 // pred_check_branch
        %167 = sbr.rel (%p165) target = $region20
      $region19: #{tpu_custom_call.1} parent=11 // pred_region
        _
      $region20: #{tpu_custom_call.1} parent=11 // pred_fallthru
        _
      // Predicated region
      $region21: #{tpu_custom_call.1} parent=11 // pred_check
        %p168 = pneg %p100
      $region22: #{tpu_custom_call.1} parent=11 // pred_check_branch
        %170 = sbr.rel (%p168) target = $region24
      $region23: #{tpu_custom_call.1} parent=11 // pred_region
        _
      $region24: #{tpu_custom_call.1} parent=11 // pred_fallthru
        _
      // Predicated region
      $region25: #{tpu_custom_call.1} parent=11 // pred_check
        %p171 = pneg %p121
      $region26: #{tpu_custom_call.1} parent=11 // pred_check_branch
        %173 = sbr.rel (%p171) target = $region28
      $region27: #{tpu_custom_call.1} parent=11 // pred_region
        _
      $region28: #{tpu_custom_call.1} parent=11 // pred_fallthru
        _
    $region12: #{tpu_custom_call.1} parent=5 // pred_fallthru
      _
    %p174 = scmp.lt.s32.totalorder %s11, 2
    // Predicated region
    $region29: #{tpu_custom_call.1} parent=5 // pred_check
      %p175 = pneg %p174
    $region30: #{tpu_custom_call.1} parent=5 // pred_check_branch
      %177 = sbr.rel (%p175) target = $region32
    $region31: #{tpu_custom_call.1} parent=5 // pred_region
      // Predicated region
      $region33: #{tpu_custom_call.1} parent=31 // pred_check
        %p178 = pneg %p31
      $region34: #{tpu_custom_call.1} parent=31 // pred_check_branch
        %180 = sbr.rel (%p178) target = $region36
      $region35: #{tpu_custom_call.1} parent=31 // pred_region
        %p181 = scmp.lt.s32.totalorder %s11, 1
        %s182 = scalar_select %p181, %s11, 1
        %s183 = smul.addr %s182, 54
        %s184 = smul.addr %s183, 8
        %s185 = scalar_lea.vmem %s0, %s184
      $region36: #{tpu_custom_call.1} parent=31 // pred_fallthru
        _
    $region32: #{tpu_custom_call.1} parent=5 // pred_fallthru
      _
    %p186 = scmp.le.s32.totalorder 1, %s11
    %p187 = scmp.lt.s32.totalorder %s11, 3
    %p188 = pnand %p186, %p187
    %p189 = pneg %p188
    // Predicated region
    $region37: #{tpu_custom_call.1} parent=5 // pred_check
      _
    $region38: #{tpu_custom_call.1} parent=5 // pred_check_branch
      %191 = sbr.rel (%p188) target = $region40
    $region39: #{tpu_custom_call.1} parent=5 // pred_region
      %s192 = ssub.s32 %s11, 1
      %p193 = scmp.lt.s32.totalorder %s16, 1
      %s194 = scalar_select %p193, %s16, 1
      %s195 = smul.addr %s194, 54
      %s196 = smul.addr %s195, 8
      %s197 = scalar_lea.vmem %s0, %s196
      %p198 = pneg %p37
      %p199 = pneg %p34
      %p200 = pneg %p58
      %p201 = pneg %p55
      %p202 = pneg %p79
      %p203 = pneg %p76
      %p204 = pneg %p100
      %p205 = pneg %p97
      %p206 = pneg %p121
      %p207 = pneg %p118
      %p208 = pneg %p147
      %p209 = pneg %p144
      %p210 = scmp.lt.s32.totalorder %s16, 1
      %s211 = scalar_select %p210, %s16, 1
      %s212 = smul.addr %s211, 64
      %s213 = smul.addr %s212, 8
      %s214 = scalar_lea.vmem %s5, %s213
      %p215 = scmp.lt.s32.totalorder %s16, 1
      %s216 = scalar_select %p215, %s16, 1
      %s217 = smul.addr %s216, 54
      %s218 = smul.addr %s217, 8
      %s219 = scalar_lea.vmem %s0, %s218
      %p220 = scmp.lt.s32.totalorder %s16, 1
      %s221 = scalar_select %p220, %s16, 1
      %s222 = smul.addr %s221, 64
      %s223 = smul.addr %s222, 8
      %s224 = scalar_lea.vmem %s5, %s223
      %v226 = vld [vmem:[%s219] sm:$0xff]
      %v227 = vld [vmem:[%s219 + $0x8] sm:$0xff]
      %v228 = vld [vmem:[%s219 + $0x10] sm:$0x3]
      %v229 = vld [vmem:[%s219 + $0x18] sm:$0xff]
      %v230 = vld [vmem:[%s219 + $0x20] sm:$0xff]
      %v231 = vld [vmem:[%s219 + $0x28] sm:$0x3]
      %v232 = vld [vmem:[%s219 + $0x30] sm:$0xff]
      %v233 = vld [vmem:[%s219 + $0x38] sm:$0xff]
      %v234 = vld [vmem:[%s219 + $0x40] sm:$0x3]
      %v235 = vld [vmem:[%s219 + $0x48] sm:$0xff]
      %v236 = vld [vmem:[%s219 + $0x50] sm:$0xff]
      %v237 = vld [vmem:[%s219 + $0x58] sm:$0x3]
      %v238 = vld [vmem:[%s219 + $0x60] sm:$0xff]
      %v239 = vld [vmem:[%s219 + $0x68] sm:$0xff]
      %v240 = vld [vmem:[%s219 + $0x70] sm:$0x3]
      %v241 = vld [vmem:[%s219 + $0x78] sm:$0xff]
      %v242 = vld [vmem:[%s219 + $0x80] sm:$0xff]
      %v243 = vld [vmem:[%s219 + $0x88] sm:$0x3]
      %v244 = vld [vmem:[%s219 + $0x90] sm:$0xff]
      %v245 = vld [vmem:[%s219 + $0x98] sm:$0xff]
      %v246 = vld [vmem:[%s219 + $0xa0] sm:$0x3]
      %v247 = vld [vmem:[%s219 + $0xa8] sm:$0xff]
      %v248 = vld [vmem:[%s219 + $0xb0] sm:$0xff]
      %v249 = vld [vmem:[%s219 + $0xb8] sm:$0x3]
      %v250 = vld [vmem:[%s219 + $0xc0] sm:$0xff]
      %v251 = vld [vmem:[%s219 + $0xc8] sm:$0xff]
      %v252 = vld [vmem:[%s219 + $0xd0] sm:$0x3]
      %v253 = vld [vmem:[%s219 + $0xd8] sm:$0xff]
      %v254 = vld [vmem:[%s219 + $0xe0] sm:$0xff]
      %v255 = vld [vmem:[%s219 + $0xe8] sm:$0x3]
      %v256 = vld [vmem:[%s219 + $0xf0] sm:$0xff]
      %v257 = vld [vmem:[%s219 + $0xf8] sm:$0xff]
      %v258 = vld [vmem:[%s219 + $0x100] sm:$0x3]
      %v259 = vld [vmem:[%s219 + $0x108] sm:$0xff]
      %v260 = vld [vmem:[%s219 + $0x110] sm:$0xff]
      %v261 = vld [vmem:[%s219 + $0x118] sm:$0x3]
      %v262 = vld [vmem:[%s219 + $0x120] sm:$0xff]
      %v263 = vld [vmem:[%s219 + $0x128] sm:$0xff]
      %v264 = vld [vmem:[%s219 + $0x130] sm:$0x3]
      %v265 = vld [vmem:[%s219 + $0x138] sm:$0xff]
      %v266 = vld [vmem:[%s219 + $0x140] sm:$0xff]
      %v267 = vld [vmem:[%s219 + $0x148] sm:$0x3]
      %v268 = vld [vmem:[%s219 + $0x150] sm:$0xff]
      %v269 = vld [vmem:[%s219 + $0x158] sm:$0xff]
      %v270 = vld [vmem:[%s219 + $0x160] sm:$0x3]
      %v271 = vld [vmem:[%s219 + $0x168] sm:$0xff]
      %v272 = vld [vmem:[%s219 + $0x170] sm:$0xff]
      %v273 = vld [vmem:[%s219 + $0x178] sm:$0x3]
      %v274 = vld [vmem:[%s219 + $0x180] sm:$0xff]
      %v275 = vld [vmem:[%s219 + $0x188] sm:$0xff]
      %v276 = vld [vmem:[%s219 + $0x190] sm:$0x3]
      %v277 = vld [vmem:[%s219 + $0x198] sm:$0xff]
      %v278 = vld [vmem:[%s219 + $0x1a0] sm:$0xff]
      %v279 = vld [vmem:[%s219 + $0x1a8] sm:$0x3]
      %vm328 = vcmask 1046528
      %v329 = vrot.slane %v226, 1
      %v330 = vrot.slane %v227, 1
      %v331 = vsel %vm328, %v329, %v330
      %v332 = vrot.slane %v228, 1
      %v333 = vsel %vm328, %v330, %v332
      %v334 = vrot.slane %v229, 1
      %v335 = vrot.slane %v230, 1
      %v336 = vsel %vm328, %v334, %v335
      %v337 = vrot.slane %v231, 1
      %v338 = vsel %vm328, %v335, %v337
      %v339 = vrot.slane %v232, 1
      %v340 = vrot.slane %v233, 1
      %v341 = vsel %vm328, %v339, %v340
      %v342 = vrot.slane %v234, 1
      %v343 = vsel %vm328, %v340, %v342
      %v344 = vrot.slane %v235, 1
      %v345 = vrot.slane %v236, 1
      %v346 = vsel %vm328, %v344, %v345
      %v347 = vrot.slane %v237, 1
      %v348 = vsel %vm328, %v345, %v347
      %v349 = vrot.slane %v238, 1
      %v350 = vrot.slane %v239, 1
      %v351 = vsel %vm328, %v349, %v350
      %v352 = vrot.slane %v240, 1
      %v353 = vsel %vm328, %v350, %v352
      %v354 = vrot.slane %v241, 1
      %v355 = vrot.slane %v242, 1
      %v356 = vsel %vm328, %v354, %v355
      %v357 = vrot.slane %v243, 1
      %v358 = vsel %vm328, %v355, %v357
      %v359 = vrot.slane %v244, 1
      %v360 = vrot.slane %v245, 1
      %v361 = vsel %vm328, %v359, %v360
      %v362 = vrot.slane %v246, 1
      %v363 = vsel %vm328, %v360, %v362
      %v364 = vrot.slane %v247, 1
      %v365 = vrot.slane %v248, 1
      %v366 = vsel %vm328, %v364, %v365
      %v367 = vrot.slane %v249, 1
      %v368 = vsel %vm328, %v365, %v367
      %v369 = vrot.slane %v250, 1
      %v370 = vrot.slane %v251, 1
      %v371 = vsel %vm328, %v369, %v370
      %v372 = vrot.slane %v252, 1
      %v373 = vsel %vm328, %v370, %v372
      %v374 = vrot.slane %v253, 1
      %v375 = vrot.slane %v254, 1
      %v376 = vsel %vm328, %v374, %v375
      %v377 = vrot.slane %v255, 1
      %v378 = vsel %vm328, %v375, %v377
      %v379 = vrot.slane %v256, 1
      %v380 = vrot.slane %v257, 1
      %v381 = vsel %vm328, %v379, %v380
      %v382 = vrot.slane %v258, 1
      %v383 = vsel %vm328, %v380, %v382
      %v384 = vrot.slane %v259, 1
      %v385 = vrot.slane %v260, 1
      %v386 = vsel %vm328, %v384, %v385
      %v387 = vrot.slane %v261, 1
      %v388 = vsel %vm328, %v385, %v387
      %v389 = vrot.slane %v262, 1
      %v390 = vrot.slane %v263, 1
      %v391 = vsel %vm328, %v389, %v390
      %v392 = vrot.slane %v264, 1
      %v393 = vsel %vm328, %v390, %v392
      %v394 = vrot.slane %v265, 1
      %v395 = vrot.slane %v266, 1
      %v396 = vsel %vm328, %v394, %v395
      %v397 = vrot.slane %v267, 1
      %v398 = vsel %vm328, %v395, %v397
      %v399 = vrot.slane %v268, 1
      %v400 = vrot.slane %v269, 1
      %v401 = vsel %vm328, %v399, %v400
      %v402 = vrot.slane %v270, 1
      %v403 = vsel %vm328, %v400, %v402
      %v404 = vrot.slane %v271, 1
      %v405 = vrot.slane %v272, 1
      %v406 = vsel %vm328, %v404, %v405
      %v407 = vrot.slane %v273, 1
      %v408 = vsel %vm328, %v405, %v407
      %409 = vrot.lane.b32.xlu0 %v331, 4
      %v410 = vpop.permute.xlu0 %409
      %411 = vrot.lane.b32.xlu0 %v333, 4
      %v412 = vpop.permute.xlu0 %411
      %413 = vrot.lane.b32.xlu0 %v336, 4
      %v414 = vpop.permute.xlu0 %413
      %415 = vrot.lane.b32.xlu0 %v338, 4
      %v416 = vpop.permute.xlu0 %415
      %417 = vrot.lane.b32.xlu0 %v341, 4
      %v418 = vpop.permute.xlu0 %417
      %419 = vrot.lane.b32.xlu0 %v343, 4
      %v420 = vpop.permute.xlu0 %419
      %421 = vrot.lane.b32.xlu0 %v346, 4
      %v422 = vpop.permute.xlu0 %421
      %423 = vrot.lane.b32.xlu0 %v348, 4
      %v424 = vpop.permute.xlu0 %423
      %425 = vrot.lane.b32.xlu0 %v351, 4
      %v426 = vpop.permute.xlu0 %425
      %427 = vrot.lane.b32.xlu0 %v353, 4
      %v428 = vpop.permute.xlu0 %427
      %429 = vrot.lane.b32.xlu0 %v356, 4
      %v430 = vpop.permute.xlu0 %429
      %431 = vrot.lane.b32.xlu0 %v358, 4
      %v432 = vpop.permute.xlu0 %431
      %433 = vrot.lane.b32.xlu0 %v361, 4
      %v434 = vpop.permute.xlu0 %433
      %435 = vrot.lane.b32.xlu0 %v363, 4
      %v436 = vpop.permute.xlu0 %435
      %437 = vrot.lane.b32.xlu0 %v366, 4
      %v438 = vpop.permute.xlu0 %437
      %439 = vrot.lane.b32.xlu0 %v368, 4
      %v440 = vpop.permute.xlu0 %439
      %441 = vrot.lane.b32.xlu0 %v371, 4
      %v442 = vpop.permute.xlu0 %441
      %443 = vrot.lane.b32.xlu0 %v373, 4
      %v444 = vpop.permute.xlu0 %443
      %445 = vrot.lane.b32.xlu0 %v376, 4
      %v446 = vpop.permute.xlu0 %445
      %447 = vrot.lane.b32.xlu0 %v378, 4
      %v448 = vpop.permute.xlu0 %447
      %449 = vrot.lane.b32.xlu0 %v381, 4
      %v450 = vpop.permute.xlu0 %449
      %451 = vrot.lane.b32.xlu0 %v383, 4
      %v452 = vpop.permute.xlu0 %451
      %453 = vrot.lane.b32.xlu0 %v386, 4
      %v454 = vpop.permute.xlu0 %453
      %455 = vrot.lane.b32.xlu0 %v388, 4
      %v456 = vpop.permute.xlu0 %455
      %457 = vrot.lane.b32.xlu0 %v391, 4
      %v458 = vpop.permute.xlu0 %457
      %459 = vrot.lane.b32.xlu0 %v393, 4
      %v460 = vpop.permute.xlu0 %459
      %461 = vrot.lane.b32.xlu0 %v396, 4
      %v462 = vpop.permute.xlu0 %461
      %463 = vrot.lane.b32.xlu0 %v398, 4
      %v464 = vpop.permute.xlu0 %463
      %465 = vrot.lane.b32.xlu0 %v401, 4
      %v466 = vpop.permute.xlu0 %465
      %467 = vrot.lane.b32.xlu0 %v403, 4
      %v468 = vpop.permute.xlu0 %467
      %469 = vrot.lane.b32.xlu0 %v406, 4
      %v470 = vpop.permute.xlu0 %469
      %471 = vrot.lane.b32.xlu0 %v408, 4
      %v472 = vpop.permute.xlu0 %471
      %vm505 = vcmask 1045504
      %v506 = vrot.slane %v226, 2
      %v507 = vrot.slane %v227, 2
      %v508 = vsel %vm505, %v506, %v507
      %v509 = vrot.slane %v228, 2
      %v510 = vsel %vm505, %v507, %v509
      %v511 = vrot.slane %v229, 2
      %v512 = vrot.slane %v230, 2
      %v513 = vsel %vm505, %v511, %v512
      %v514 = vrot.slane %v231, 2
      %v515 = vsel %vm505, %v512, %v514
      %v516 = vrot.slane %v232, 2
      %v517 = vrot.slane %v233, 2
      %v518 = vsel %vm505, %v516, %v517
      %v519 = vrot.slane %v234, 2
      %v520 = vsel %vm505, %v517, %v519
      %v521 = vrot.slane %v235, 2
      %v522 = vrot.slane %v236, 2
      %v523 = vsel %vm505, %v521, %v522
      %v524 = vrot.slane %v237, 2
      %v525 = vsel %vm505, %v522, %v524
      %v526 = vrot.slane %v238, 2
      %v527 = vrot.slane %v239, 2
      %v528 = vsel %vm505, %v526, %v527
      %v529 = vrot.slane %v240, 2
      %v530 = vsel %vm505, %v527, %v529
      %v531 = vrot.slane %v241, 2
      %v532 = vrot.slane %v242, 2
      %v533 = vsel %vm505, %v531, %v532
      %v534 = vrot.slane %v243, 2
      %v535 = vsel %vm505, %v532, %v534
      %v536 = vrot.slane %v244, 2
      %v537 = vrot.slane %v245, 2
      %v538 = vsel %vm505, %v536, %v537
      %v539 = vrot.slane %v246, 2
      %v540 = vsel %vm505, %v537, %v539
      %v541 = vrot.slane %v247, 2
      %v542 = vrot.slane %v248, 2
      %v543 = vsel %vm505, %v541, %v542
      %v544 = vrot.slane %v249, 2
      %v545 = vsel %vm505, %v542, %v544
      %v546 = vrot.slane %v250, 2
      %v547 = vrot.slane %v251, 2
      %v548 = vsel %vm505, %v546, %v547
      %v549 = vrot.slane %v252, 2
      %v550 = vsel %vm505, %v547, %v549
      %v551 = vrot.slane %v253, 2
      %v552 = vrot.slane %v254, 2
      %v553 = vsel %vm505, %v551, %v552
      %v554 = vrot.slane %v255, 2
      %v555 = vsel %vm505, %v552, %v554
      %v556 = vrot.slane %v256, 2
      %v557 = vrot.slane %v257, 2
      %v558 = vsel %vm505, %v556, %v557
      %v559 = vrot.slane %v258, 2
      %v560 = vsel %vm505, %v557, %v559
      %v561 = vrot.slane %v259, 2
      %v562 = vrot.slane %v260, 2
      %v563 = vsel %vm505, %v561, %v562
      %v564 = vrot.slane %v261, 2
      %v565 = vsel %vm505, %v562, %v564
      %v566 = vrot.slane %v262, 2
      %v567 = vrot.slane %v263, 2
      %v568 = vsel %vm505, %v566, %v567
      %v569 = vrot.slane %v264, 2
      %v570 = vsel %vm505, %v567, %v569
      %v571 = vrot.slane %v265, 2
      %v572 = vrot.slane %v266, 2
      %v573 = vsel %vm505, %v571, %v572
      %v574 = vrot.slane %v267, 2
      %v575 = vsel %vm505, %v572, %v574
      %v576 = vrot.slane %v268, 2
      %v577 = vrot.slane %v269, 2
      %v578 = vsel %vm505, %v576, %v577
      %v579 = vrot.slane %v270, 2
      %v580 = vsel %vm505, %v577, %v579
      %v581 = vrot.slane %v271, 2
      %v582 = vrot.slane %v272, 2
      %v583 = vsel %vm505, %v581, %v582
      %v584 = vrot.slane %v273, 2
      %v585 = vsel %vm505, %v582, %v584
      %586 = vrot.lane.b32.xlu0 %v508, 8
      %v587 = vpop.permute.xlu0 %586
      %588 = vrot.lane.b32.xlu0 %v510, 8
      %v589 = vpop.permute.xlu0 %588
      %590 = vrot.lane.b32.xlu0 %v513, 8
      %v591 = vpop.permute.xlu0 %590
      %592 = vrot.lane.b32.xlu0 %v515, 8
      %v593 = vpop.permute.xlu0 %592
      %594 = vrot.lane.b32.xlu0 %v518, 8
      %v595 = vpop.permute.xlu0 %594
      %596 = vrot.lane.b32.xlu0 %v520, 8
      %v597 = vpop.permute.xlu0 %596
      %598 = vrot.lane.b32.xlu0 %v523, 8
      %v599 = vpop.permute.xlu0 %598
      %600 = vrot.lane.b32.xlu0 %v525, 8
      %v601 = vpop.permute.xlu0 %600
      %602 = vrot.lane.b32.xlu0 %v528, 8
      %v603 = vpop.permute.xlu0 %602
      %604 = vrot.lane.b32.xlu0 %v530, 8
      %v605 = vpop.permute.xlu0 %604
      %606 = vrot.lane.b32.xlu0 %v533, 8
      %v607 = vpop.permute.xlu0 %606
      %608 = vrot.lane.b32.xlu0 %v535, 8
      %v609 = vpop.permute.xlu0 %608
      %610 = vrot.lane.b32.xlu0 %v538, 8
      %v611 = vpop.permute.xlu0 %610
      %612 = vrot.lane.b32.xlu0 %v540, 8
      %v613 = vpop.permute.xlu0 %612
      %614 = vrot.lane.b32.xlu0 %v543, 8
      %v615 = vpop.permute.xlu0 %614
      %616 = vrot.lane.b32.xlu0 %v545, 8
      %v617 = vpop.permute.xlu0 %616
      %618 = vrot.lane.b32.xlu0 %v548, 8
      %v619 = vpop.permute.xlu0 %618
      %620 = vrot.lane.b32.xlu0 %v550, 8
      %v621 = vpop.permute.xlu0 %620
      %622 = vrot.lane.b32.xlu0 %v553, 8
      %v623 = vpop.permute.xlu0 %622
      %624 = vrot.lane.b32.xlu0 %v555, 8
      %v625 = vpop.permute.xlu0 %624
      %626 = vrot.lane.b32.xlu0 %v558, 8
      %v627 = vpop.permute.xlu0 %626
      %628 = vrot.lane.b32.xlu0 %v560, 8
      %v629 = vpop.permute.xlu0 %628
      %630 = vrot.lane.b32.xlu0 %v563, 8
      %v631 = vpop.permute.xlu0 %630
      %632 = vrot.lane.b32.xlu0 %v565, 8
      %v633 = vpop.permute.xlu0 %632
      %634 = vrot.lane.b32.xlu0 %v568, 8
      %v635 = vpop.permute.xlu0 %634
      %636 = vrot.lane.b32.xlu0 %v570, 8
      %v637 = vpop.permute.xlu0 %636
      %638 = vrot.lane.b32.xlu0 %v573, 8
      %v639 = vpop.permute.xlu0 %638
      %640 = vrot.lane.b32.xlu0 %v575, 8
      %v641 = vpop.permute.xlu0 %640
      %642 = vrot.lane.b32.xlu0 %v578, 8
      %v643 = vpop.permute.xlu0 %642
      %644 = vrot.lane.b32.xlu0 %v580, 8
      %v645 = vpop.permute.xlu0 %644
      %646 = vrot.lane.b32.xlu0 %v583, 8
      %v647 = vpop.permute.xlu0 %646
      %648 = vrot.lane.b32.xlu0 %v585, 8
      %v649 = vpop.permute.xlu0 %648
      %684 = vrot.lane.b32.xlu0 %v229, 12
      %v685 = vpop.permute.xlu0 %684
      %686 = vrot.lane.b32.xlu0 %v230, 12
      %v687 = vpop.permute.xlu0 %686
      %688 = vrot.lane.b32.xlu0 %v232, 12
      %v689 = vpop.permute.xlu0 %688
      %690 = vrot.lane.b32.xlu0 %v233, 12
      %v691 = vpop.permute.xlu0 %690
      %692 = vrot.lane.b32.xlu0 %v235, 12
      %v693 = vpop.permute.xlu0 %692
      %694 = vrot.lane.b32.xlu0 %v236, 12
      %v695 = vpop.permute.xlu0 %694
      %696 = vrot.lane.b32.xlu0 %v238, 12
      %v697 = vpop.permute.xlu0 %696
      %698 = vrot.lane.b32.xlu0 %v239, 12
      %v699 = vpop.permute.xlu0 %698
      %700 = vrot.lane.b32.xlu0 %v241, 12
      %v701 = vpop.permute.xlu0 %700
      %702 = vrot.lane.b32.xlu0 %v242, 12
      %v703 = vpop.permute.xlu0 %702
      %704 = vrot.lane.b32.xlu0 %v244, 12
      %v705 = vpop.permute.xlu0 %704
      %706 = vrot.lane.b32.xlu0 %v245, 12
      %v707 = vpop.permute.xlu0 %706
      %708 = vrot.lane.b32.xlu0 %v247, 12
      %v709 = vpop.permute.xlu0 %708
      %710 = vrot.lane.b32.xlu0 %v248, 12
      %v711 = vpop.permute.xlu0 %710
      %712 = vrot.lane.b32.xlu0 %v250, 12
      %v713 = vpop.permute.xlu0 %712
      %714 = vrot.lane.b32.xlu0 %v251, 12
      %v715 = vpop.permute.xlu0 %714
      %716 = vrot.lane.b32.xlu0 %v253, 12
      %v717 = vpop.permute.xlu0 %716
      %718 = vrot.lane.b32.xlu0 %v254, 12
      %v719 = vpop.permute.xlu0 %718
      %720 = vrot.lane.b32.xlu0 %v256, 12
      %v721 = vpop.permute.xlu0 %720
      %722 = vrot.lane.b32.xlu0 %v257, 12
      %v723 = vpop.permute.xlu0 %722
      %724 = vrot.lane.b32.xlu0 %v259, 12
      %v725 = vpop.permute.xlu0 %724
      %726 = vrot.lane.b32.xlu0 %v260, 12
      %v727 = vpop.permute.xlu0 %726
      %728 = vrot.lane.b32.xlu0 %v262, 12
      %v729 = vpop.permute.xlu0 %728
      %730 = vrot.lane.b32.xlu0 %v263, 12
      %v731 = vpop.permute.xlu0 %730
      %732 = vrot.lane.b32.xlu0 %v265, 12
      %v733 = vpop.permute.xlu0 %732
      %734 = vrot.lane.b32.xlu0 %v266, 12
      %v735 = vpop.permute.xlu0 %734
      %736 = vrot.lane.b32.xlu0 %v268, 12
      %v737 = vpop.permute.xlu0 %736
      %738 = vrot.lane.b32.xlu0 %v269, 12
      %v739 = vpop.permute.xlu0 %738
      %740 = vrot.lane.b32.xlu0 %v271, 12
      %v741 = vpop.permute.xlu0 %740
      %742 = vrot.lane.b32.xlu0 %v272, 12
      %v743 = vpop.permute.xlu0 %742
      %744 = vrot.lane.b32.xlu0 %v274, 12
      %v745 = vpop.permute.xlu0 %744
      %746 = vrot.lane.b32.xlu0 %v275, 12
      %v747 = vpop.permute.xlu0 %746
      %v781 = vrot.slane %v274, 1
      %v782 = vrot.slane %v275, 1
      %v783 = vsel %vm328, %v781, %v782
      %v784 = vrot.slane %v276, 1
      %v785 = vsel %vm328, %v782, %v784
      %786 = vrot.lane.b32.xlu0 %v336, 16
      %v787 = vpop.permute.xlu0 %786
      %788 = vrot.lane.b32.xlu0 %v338, 16
      %v789 = vpop.permute.xlu0 %788
      %790 = vrot.lane.b32.xlu0 %v341, 16
      %v791 = vpop.permute.xlu0 %790
      %792 = vrot.lane.b32.xlu0 %v343, 16
      %v793 = vpop.permute.xlu0 %792
      %794 = vrot.lane.b32.xlu0 %v346, 16
      %v795 = vpop.permute.xlu0 %794
      %796 = vrot.lane.b32.xlu0 %v348, 16
      %v797 = vpop.permute.xlu0 %796
      %798 = vrot.lane.b32.xlu0 %v351, 16
      %v799 = vpop.permute.xlu0 %798
      %800 = vrot.lane.b32.xlu0 %v353, 16
      %v801 = vpop.permute.xlu0 %800
      %802 = vrot.lane.b32.xlu0 %v356, 16
      %v803 = vpop.permute.xlu0 %802
      %804 = vrot.lane.b32.xlu0 %v358, 16
      %v805 = vpop.permute.xlu0 %804
      %806 = vrot.lane.b32.xlu0 %v361, 16
      %v807 = vpop.permute.xlu0 %806
      %808 = vrot.lane.b32.xlu0 %v363, 16
      %v809 = vpop.permute.xlu0 %808
      %810 = vrot.lane.b32.xlu0 %v366, 16
      %v811 = vpop.permute.xlu0 %810
      %812 = vrot.lane.b32.xlu0 %v368, 16
      %v813 = vpop.permute.xlu0 %812
      %814 = vrot.lane.b32.xlu0 %v371, 16
      %v815 = vpop.permute.xlu0 %814
      %816 = vrot.lane.b32.xlu0 %v373, 16
      %v817 = vpop.permute.xlu0 %816
      %818 = vrot.lane.b32.xlu0 %v376, 16
      %v819 = vpop.permute.xlu0 %818
      %820 = vrot.lane.b32.xlu0 %v378, 16
      %v821 = vpop.permute.xlu0 %820
      %822 = vrot.lane.b32.xlu0 %v381, 16
      %v823 = vpop.permute.xlu0 %822
      %824 = vrot.lane.b32.xlu0 %v383, 16
      %v825 = vpop.permute.xlu0 %824
      %826 = vrot.lane.b32.xlu0 %v386, 16
      %v827 = vpop.permute.xlu0 %826
      %828 = vrot.lane.b32.xlu0 %v388, 16
      %v829 = vpop.permute.xlu0 %828
      %830 = vrot.lane.b32.xlu0 %v391, 16
      %v831 = vpop.permute.xlu0 %830
      %832 = vrot.lane.b32.xlu0 %v393, 16
      %v833 = vpop.permute.xlu0 %832
      %834 = vrot.lane.b32.xlu0 %v396, 16
      %v835 = vpop.permute.xlu0 %834
      %836 = vrot.lane.b32.xlu0 %v398, 16
      %v837 = vpop.permute.xlu0 %836
      %838 = vrot.lane.b32.xlu0 %v401, 16
      %v839 = vpop.permute.xlu0 %838
      %840 = vrot.lane.b32.xlu0 %v403, 16
      %v841 = vpop.permute.xlu0 %840
      %842 = vrot.lane.b32.xlu0 %v406, 16
      %v843 = vpop.permute.xlu0 %842
      %844 = vrot.lane.b32.xlu0 %v408, 16
      %v845 = vpop.permute.xlu0 %844
      %846 = vrot.lane.b32.xlu0 %v783, 16
      %v847 = vpop.permute.xlu0 %846
      %848 = vrot.lane.b32.xlu0 %v785, 16
      %v849 = vpop.permute.xlu0 %848
      %v882 = vrot.slane %v274, 2
      %v883 = vrot.slane %v275, 2
      %v884 = vsel %vm505, %v882, %v883
      %v885 = vrot.slane %v276, 2
      %v886 = vsel %vm505, %v883, %v885
      %887 = vrot.lane.b32.xlu0 %v513, 20
      %v888 = vpop.permute.xlu0 %887
      %889 = vrot.lane.b32.xlu0 %v515, 20
      %v890 = vpop.permute.xlu0 %889
      %891 = vrot.lane.b32.xlu0 %v518, 20
      %v892 = vpop.permute.xlu0 %891
      %893 = vrot.lane.b32.xlu0 %v520, 20
      %v894 = vpop.permute.xlu0 %893
      %895 = vrot.lane.b32.xlu0 %v523, 20
      %v896 = vpop.permute.xlu0 %895
      %897 = vrot.lane.b32.xlu0 %v525, 20
      %v898 = vpop.permute.xlu0 %897
      %899 = vrot.lane.b32.xlu0 %v528, 20
      %v900 = vpop.permute.xlu0 %899
      %901 = vrot.lane.b32.xlu0 %v530, 20
      %v902 = vpop.permute.xlu0 %901
      %903 = vrot.lane.b32.xlu0 %v533, 20
      %v904 = vpop.permute.xlu0 %903
      %905 = vrot.lane.b32.xlu0 %v535, 20
      %v906 = vpop.permute.xlu0 %905
      %907 = vrot.lane.b32.xlu0 %v538, 20
      %v908 = vpop.permute.xlu0 %907
      %909 = vrot.lane.b32.xlu0 %v540, 20
      %v910 = vpop.permute.xlu0 %909
      %911 = vrot.lane.b32.xlu0 %v543, 20
      %v912 = vpop.permute.xlu0 %911
      %913 = vrot.lane.b32.xlu0 %v545, 20
      %v914 = vpop.permute.xlu0 %913
      %915 = vrot.lane.b32.xlu0 %v548, 20
      %v916 = vpop.permute.xlu0 %915
      %917 = vrot.lane.b32.xlu0 %v550, 20
      %v918 = vpop.permute.xlu0 %917
      %919 = vrot.lane.b32.xlu0 %v553, 20
      %v920 = vpop.permute.xlu0 %919
      %921 = vrot.lane.b32.xlu0 %v555, 20
      %v922 = vpop.permute.xlu0 %921
      %923 = vrot.lane.b32.xlu0 %v558, 20
      %v924 = vpop.permute.xlu0 %923
      %925 = vrot.lane.b32.xlu0 %v560, 20
      %v926 = vpop.permute.xlu0 %925
      %927 = vrot.lane.b32.xlu0 %v563, 20
      %v928 = vpop.permute.xlu0 %927
      %929 = vrot.lane.b32.xlu0 %v565, 20
      %v930 = vpop.permute.xlu0 %929
      %931 = vrot.lane.b32.xlu0 %v568, 20
      %v932 = vpop.permute.xlu0 %931
      %933 = vrot.lane.b32.xlu0 %v570, 20
      %v934 = vpop.permute.xlu0 %933
      %935 = vrot.lane.b32.xlu0 %v573, 20
      %v936 = vpop.permute.xlu0 %935
      %937 = vrot.lane.b32.xlu0 %v575, 20
      %v938 = vpop.permute.xlu0 %937
      %939 = vrot.lane.b32.xlu0 %v578, 20
      %v940 = vpop.permute.xlu0 %939
      %941 = vrot.lane.b32.xlu0 %v580, 20
      %v942 = vpop.permute.xlu0 %941
      %943 = vrot.lane.b32.xlu0 %v583, 20
      %v944 = vpop.permute.xlu0 %943
      %945 = vrot.lane.b32.xlu0 %v585, 20
      %v946 = vpop.permute.xlu0 %945
      %947 = vrot.lane.b32.xlu0 %v884, 20
      %v948 = vpop.permute.xlu0 %947
      %949 = vrot.lane.b32.xlu0 %v886, 20
      %v950 = vpop.permute.xlu0 %949
      %985 = vrot.lane.b32.xlu0 %v232, 24
      %v986 = vpop.permute.xlu0 %985
      %987 = vrot.lane.b32.xlu0 %v233, 24
      %v988 = vpop.permute.xlu0 %987
      %989 = vrot.lane.b32.xlu0 %v235, 24
      %v990 = vpop.permute.xlu0 %989
      %991 = vrot.lane.b32.xlu0 %v236, 24
      %v992 = vpop.permute.xlu0 %991
      %993 = vrot.lane.b32.xlu0 %v238, 24
      %v994 = vpop.permute.xlu0 %993
      %995 = vrot.lane.b32.xlu0 %v239, 24
      %v996 = vpop.permute.xlu0 %995
      %997 = vrot.lane.b32.xlu0 %v241, 24
      %v998 = vpop.permute.xlu0 %997
      %999 = vrot.lane.b32.xlu0 %v242, 24
      %v1000 = vpop.permute.xlu0 %999
      %1001 = vrot.lane.b32.xlu0 %v244, 24
      %v1002 = vpop.permute.xlu0 %1001
      %1003 = vrot.lane.b32.xlu0 %v245, 24
      %v1004 = vpop.permute.xlu0 %1003
      %1005 = vrot.lane.b32.xlu0 %v247, 24
      %v1006 = vpop.permute.xlu0 %1005
      %1007 = vrot.lane.b32.xlu0 %v248, 24
      %v1008 = vpop.permute.xlu0 %1007
      %1009 = vrot.lane.b32.xlu0 %v250, 24
      %v1010 = vpop.permute.xlu0 %1009
      %1011 = vrot.lane.b32.xlu0 %v251, 24
      %v1012 = vpop.permute.xlu0 %1011
      %1013 = vrot.lane.b32.xlu0 %v253, 24
      %v1014 = vpop.permute.xlu0 %1013
      %1015 = vrot.lane.b32.xlu0 %v254, 24
      %v1016 = vpop.permute.xlu0 %1015
      %1017 = vrot.lane.b32.xlu0 %v256, 24
      %v1018 = vpop.permute.xlu0 %1017
      %1019 = vrot.lane.b32.xlu0 %v257, 24
      %v1020 = vpop.permute.xlu0 %1019
      %1021 = vrot.lane.b32.xlu0 %v259, 24
      %v1022 = vpop.permute.xlu0 %1021
      %1023 = vrot.lane.b32.xlu0 %v260, 24
      %v1024 = vpop.permute.xlu0 %1023
      %1025 = vrot.lane.b32.xlu0 %v262, 24
      %v1026 = vpop.permute.xlu0 %1025
      %1027 = vrot.lane.b32.xlu0 %v263, 24
      %v1028 = vpop.permute.xlu0 %1027
      %1029 = vrot.lane.b32.xlu0 %v265, 24
      %v1030 = vpop.permute.xlu0 %1029
      %1031 = vrot.lane.b32.xlu0 %v266, 24
      %v1032 = vpop.permute.xlu0 %1031
      %1033 = vrot.lane.b32.xlu0 %v268, 24
      %v1034 = vpop.permute.xlu0 %1033
      %1035 = vrot.lane.b32.xlu0 %v269, 24
      %v1036 = vpop.permute.xlu0 %1035
      %1037 = vrot.lane.b32.xlu0 %v271, 24
      %v1038 = vpop.permute.xlu0 %1037
      %1039 = vrot.lane.b32.xlu0 %v272, 24
      %v1040 = vpop.permute.xlu0 %1039
      %1041 = vrot.lane.b32.xlu0 %v274, 24
      %v1042 = vpop.permute.xlu0 %1041
      %1043 = vrot.lane.b32.xlu0 %v275, 24
      %v1044 = vpop.permute.xlu0 %1043
      %1045 = vrot.lane.b32.xlu0 %v277, 24
      %v1046 = vpop.permute.xlu0 %1045
      %1047 = vrot.lane.b32.xlu0 %v278, 24
      %v1048 = vpop.permute.xlu0 %1047
      %v1082 = vrot.slane %v277, 1
      %v1083 = vrot.slane %v278, 1
      %v1084 = vsel %vm328, %v1082, %v1083
      %v1085 = vrot.slane %v279, 1
      %v1086 = vsel %vm328, %v1083, %v1085
      %1087 = vrot.lane.b32.xlu0 %v341, 28
      %v1088 = vpop.permute.xlu0 %1087
      %1089 = vrot.lane.b32.xlu0 %v343, 28
      %v1090 = vpop.permute.xlu0 %1089
      %1091 = vrot.lane.b32.xlu0 %v346, 28
      %v1092 = vpop.permute.xlu0 %1091
      %1093 = vrot.lane.b32.xlu0 %v348, 28
      %v1094 = vpop.permute.xlu0 %1093
      %1095 = vrot.lane.b32.xlu0 %v351, 28
      %v1096 = vpop.permute.xlu0 %1095
      %1097 = vrot.lane.b32.xlu0 %v353, 28
      %v1098 = vpop.permute.xlu0 %1097
      %1099 = vrot.lane.b32.xlu0 %v356, 28
      %v1100 = vpop.permute.xlu0 %1099
      %1101 = vrot.lane.b32.xlu0 %v358, 28
      %v1102 = vpop.permute.xlu0 %1101
      %1103 = vrot.lane.b32.xlu0 %v361, 28
      %v1104 = vpop.permute.xlu0 %1103
      %1105 = vrot.lane.b32.xlu0 %v363, 28
      %v1106 = vpop.permute.xlu0 %1105
      %1107 = vrot.lane.b32.xlu0 %v366, 28
      %v1108 = vpop.permute.xlu0 %1107
      %1109 = vrot.lane.b32.xlu0 %v368, 28
      %v1110 = vpop.permute.xlu0 %1109
      %1111 = vrot.lane.b32.xlu0 %v371, 28
      %v1112 = vpop.permute.xlu0 %1111
      %1113 = vrot.lane.b32.xlu0 %v373, 28
      %v1114 = vpop.permute.xlu0 %1113
      %1115 = vrot.lane.b32.xlu0 %v376, 28
      %v1116 = vpop.permute.xlu0 %1115
      %1117 = vrot.lane.b32.xlu0 %v378, 28
      %v1118 = vpop.permute.xlu0 %1117
      %1119 = vrot.lane.b32.xlu0 %v381, 28
      %v1120 = vpop.permute.xlu0 %1119
      %1121 = vrot.lane.b32.xlu0 %v383, 28
      %v1122 = vpop.permute.xlu0 %1121
      %1123 = vrot.lane.b32.xlu0 %v386, 28
      %v1124 = vpop.permute.xlu0 %1123
      %1125 = vrot.lane.b32.xlu0 %v388, 28
      %v1126 = vpop.permute.xlu0 %1125
      %1127 = vrot.lane.b32.xlu0 %v391, 28
      %v1128 = vpop.permute.xlu0 %1127
      %1129 = vrot.lane.b32.xlu0 %v393, 28
      %v1130 = vpop.permute.xlu0 %1129
      %1131 = vrot.lane.b32.xlu0 %v396, 28
      %v1132 = vpop.permute.xlu0 %1131
      %1133 = vrot.lane.b32.xlu0 %v398, 28
      %v1134 = vpop.permute.xlu0 %1133
      %1135 = vrot.lane.b32.xlu0 %v401, 28
      %v1136 = vpop.permute.xlu0 %1135
      %1137 = vrot.lane.b32.xlu0 %v403, 28
      %v1138 = vpop.permute.xlu0 %1137
      %1139 = vrot.lane.b32.xlu0 %v406, 28
      %v1140 = vpop.permute.xlu0 %1139
      %1141 = vrot.lane.b32.xlu0 %v408, 28
      %v1142 = vpop.permute.xlu0 %1141
      %1143 = vrot.lane.b32.xlu0 %v783, 28
      %v1144 = vpop.permute.xlu0 %1143
      %1145 = vrot.lane.b32.xlu0 %v785, 28
      %v1146 = vpop.permute.xlu0 %1145
      %1147 = vrot.lane.b32.xlu0 %v1084, 28
      %v1148 = vpop.permute.xlu0 %1147
      %1149 = vrot.lane.b32.xlu0 %v1086, 28
      %v1150 = vpop.permute.xlu0 %1149
      %v1183 = vrot.slane %v277, 2
      %v1184 = vrot.slane %v278, 2
      %v1185 = vsel %vm505, %v1183, %v1184
      %v1186 = vrot.slane %v279, 2
      %v1187 = vsel %vm505, %v1184, %v1186
      %1188 = vrot.lane.b32.xlu0 %v518, 32
      %v1189 = vpop.permute.xlu0 %1188
      %1190 = vrot.lane.b32.xlu0 %v520, 32
      %v1191 = vpop.permute.xlu0 %1190
      %1192 = vrot.lane.b32.xlu0 %v523, 32
      %v1193 = vpop.permute.xlu0 %1192
      %1194 = vrot.lane.b32.xlu0 %v525, 32
      %v1195 = vpop.permute.xlu0 %1194
      %1196 = vrot.lane.b32.xlu0 %v528, 32
      %v1197 = vpop.permute.xlu0 %1196
      %1198 = vrot.lane.b32.xlu0 %v530, 32
      %v1199 = vpop.permute.xlu0 %1198
      %1200 = vrot.lane.b32.xlu0 %v533, 32
      %v1201 = vpop.permute.xlu0 %1200
      %1202 = vrot.lane.b32.xlu0 %v535, 32
      %v1203 = vpop.permute.xlu0 %1202
      %1204 = vrot.lane.b32.xlu0 %v538, 32
      %v1205 = vpop.permute.xlu0 %1204
      %1206 = vrot.lane.b32.xlu0 %v540, 32
      %v1207 = vpop.permute.xlu0 %1206
      %1208 = vrot.lane.b32.xlu0 %v543, 32
      %v1209 = vpop.permute.xlu0 %1208
      %1210 = vrot.lane.b32.xlu0 %v545, 32
      %v1211 = vpop.permute.xlu0 %1210
      %1212 = vrot.lane.b32.xlu0 %v548, 32
      %v1213 = vpop.permute.xlu0 %1212
      %1214 = vrot.lane.b32.xlu0 %v550, 32
      %v1215 = vpop.permute.xlu0 %1214
      %1216 = vrot.lane.b32.xlu0 %v553, 32
      %v1217 = vpop.permute.xlu0 %1216
      %1218 = vrot.lane.b32.xlu0 %v555, 32
      %v1219 = vpop.permute.xlu0 %1218
      %1220 = vrot.lane.b32.xlu0 %v558, 32
      %v1221 = vpop.permute.xlu0 %1220
      %1222 = vrot.lane.b32.xlu0 %v560, 32
      %v1223 = vpop.permute.xlu0 %1222
      %1224 = vrot.lane.b32.xlu0 %v563, 32
      %v1225 = vpop.permute.xlu0 %1224
      %1226 = vrot.lane.b32.xlu0 %v565, 32
      %v1227 = vpop.permute.xlu0 %1226
      %1228 = vrot.lane.b32.xlu0 %v568, 32
      %v1229 = vpop.permute.xlu0 %1228
      %1230 = vrot.lane.b32.xlu0 %v570, 32
      %v1231 = vpop.permute.xlu0 %1230
      %1232 = vrot.lane.b32.xlu0 %v573, 32
      %v1233 = vpop.permute.xlu0 %1232
      %1234 = vrot.lane.b32.xlu0 %v575, 32
      %v1235 = vpop.permute.xlu0 %1234
      %1236 = vrot.lane.b32.xlu0 %v578, 32
      %v1237 = vpop.permute.xlu0 %1236
      %1238 = vrot.lane.b32.xlu0 %v580, 32
      %v1239 = vpop.permute.xlu0 %1238
      %1240 = vrot.lane.b32.xlu0 %v583, 32
      %v1241 = vpop.permute.xlu0 %1240
      %1242 = vrot.lane.b32.xlu0 %v585, 32
      %v1243 = vpop.permute.xlu0 %1242
      %1244 = vrot.lane.b32.xlu0 %v884, 32
      %v1245 = vpop.permute.xlu0 %1244
      %1246 = vrot.lane.b32.xlu0 %v886, 32
      %v1247 = vpop.permute.xlu0 %1246
      %1248 = vrot.lane.b32.xlu0 %v1185, 32
      %v1249 = vpop.permute.xlu0 %1248
      %1250 = vrot.lane.b32.xlu0 %v1187, 32
      %v1251 = vpop.permute.xlu0 %1250
      %vm1284 = vcmask 31744
      %v1285 = vsel %vm1284, %v226, %v410
      %v1286 = vsel %vm1284, %v227, %v412
      %v1287 = vsel %vm1284, %v229, %v414
      %v1288 = vsel %vm1284, %v230, %v416
      %v1289 = vsel %vm1284, %v232, %v418
      %v1290 = vsel %vm1284, %v233, %v420
      %v1291 = vsel %vm1284, %v235, %v422
      %v1292 = vsel %vm1284, %v236, %v424
      %v1293 = vsel %vm1284, %v238, %v426
      %v1294 = vsel %vm1284, %v239, %v428
      %v1295 = vsel %vm1284, %v241, %v430
      %v1296 = vsel %vm1284, %v242, %v432
      %v1297 = vsel %vm1284, %v244, %v434
      %v1298 = vsel %vm1284, %v245, %v436
      %v1299 = vsel %vm1284, %v247, %v438
      %v1300 = vsel %vm1284, %v248, %v440
      %v1301 = vsel %vm1284, %v250, %v442
      %v1302 = vsel %vm1284, %v251, %v444
      %v1303 = vsel %vm1284, %v253, %v446
      %v1304 = vsel %vm1284, %v254, %v448
      %v1305 = vsel %vm1284, %v256, %v450
      %v1306 = vsel %vm1284, %v257, %v452
      %v1307 = vsel %vm1284, %v259, %v454
      %v1308 = vsel %vm1284, %v260, %v456
      %v1309 = vsel %vm1284, %v262, %v458
      %v1310 = vsel %vm1284, %v263, %v460
      %v1311 = vsel %vm1284, %v265, %v462
      %v1312 = vsel %vm1284, %v266, %v464
      %v1313 = vsel %vm1284, %v268, %v466
      %v1314 = vsel %vm1284, %v269, %v468
      %v1315 = vsel %vm1284, %v271, %v470
      %v1316 = vsel %vm1284, %v272, %v472
      %vm1317 = vcmask 64512
      %v1318 = vsel %vm1317, %v1285, %v587
      %v1319 = vsel %vm1317, %v1286, %v589
      %v1320 = vsel %vm1317, %v1287, %v591
      %v1321 = vsel %vm1317, %v1288, %v593
      %v1322 = vsel %vm1317, %v1289, %v595
      %v1323 = vsel %vm1317, %v1290, %v597
      %v1324 = vsel %vm1317, %v1291, %v599
      %v1325 = vsel %vm1317, %v1292, %v601
      %v1326 = vsel %vm1317, %v1293, %v603
      %v1327 = vsel %vm1317, %v1294, %v605
      %v1328 = vsel %vm1317, %v1295, %v607
      %v1329 = vsel %vm1317, %v1296, %v609
      %v1330 = vsel %vm1317, %v1297, %v611
      %v1331 = vsel %vm1317, %v1298, %v613
      %v1332 = vsel %vm1317, %v1299, %v615
      %v1333 = vsel %vm1317, %v1300, %v617
      %v1334 = vsel %vm1317, %v1301, %v619
      %v1335 = vsel %vm1317, %v1302, %v621
      %v1336 = vsel %vm1317, %v1303, %v623
      %v1337 = vsel %vm1317, %v1304, %v625
      %v1338 = vsel %vm1317, %v1305, %v627
      %v1339 = vsel %vm1317, %v1306, %v629
      %v1340 = vsel %vm1317, %v1307, %v631
      %v1341 = vsel %vm1317, %v1308, %v633
      %v1342 = vsel %vm1317, %v1309, %v635
      %v1343 = vsel %vm1317, %v1310, %v637
      %v1344 = vsel %vm1317, %v1311, %v639
      %v1345 = vsel %vm1317, %v1312, %v641
      %v1346 = vsel %vm1317, %v1313, %v643
      %v1347 = vsel %vm1317, %v1314, %v645
      %v1348 = vsel %vm1317, %v1315, %v647
      %v1349 = vsel %vm1317, %v1316, %v649
      %vm1350 = vcmask 97280
      %v1351 = vsel %vm1350, %v1318, %v685
      %v1352 = vsel %vm1350, %v1319, %v687
      %v1353 = vsel %vm1350, %v1320, %v689
      %v1354 = vsel %vm1350, %v1321, %v691
      %v1355 = vsel %vm1350, %v1322, %v693
      %v1356 = vsel %vm1350, %v1323, %v695
      %v1357 = vsel %vm1350, %v1324, %v697
      %v1358 = vsel %vm1350, %v1325, %v699
      %v1359 = vsel %vm1350, %v1326, %v701
      %v1360 = vsel %vm1350, %v1327, %v703
      %v1361 = vsel %vm1350, %v1328, %v705
      %v1362 = vsel %vm1350, %v1329, %v707
      %v1363 = vsel %vm1350, %v1330, %v709
      %v1364 = vsel %vm1350, %v1331, %v711
      %v1365 = vsel %vm1350, %v1332, %v713
      %v1366 = vsel %vm1350, %v1333, %v715
      %v1367 = vsel %vm1350, %v1334, %v717
      %v1368 = vsel %vm1350, %v1335, %v719
      %v1369 = vsel %vm1350, %v1336, %v721
      %v1370 = vsel %vm1350, %v1337, %v723
      %v1371 = vsel %vm1350, %v1338, %v725
      %v1372 = vsel %vm1350, %v1339, %v727
      %v1373 = vsel %vm1350, %v1340, %v729
      %v1374 = vsel %vm1350, %v1341, %v731
      %v1375 = vsel %vm1350, %v1342, %v733
      %v1376 = vsel %vm1350, %v1343, %v735
      %v1377 = vsel %vm1350, %v1344, %v737
      %v1378 = vsel %vm1350, %v1345, %v739
      %v1379 = vsel %vm1350, %v1346, %v741
      %v1380 = vsel %vm1350, %v1347, %v743
      %v1381 = vsel %vm1350, %v1348, %v745
      %v1382 = vsel %vm1350, %v1349, %v747
      %vm1383 = vcmask 130048
      %v1384 = vsel %vm1383, %v1351, %v787
      %v1385 = vsel %vm1383, %v1352, %v789
      %v1386 = vsel %vm1383, %v1353, %v791
      %v1387 = vsel %vm1383, %v1354, %v793
      %v1388 = vsel %vm1383, %v1355, %v795
      %v1389 = vsel %vm1383, %v1356, %v797
      %v1390 = vsel %vm1383, %v1357, %v799
      %v1391 = vsel %vm1383, %v1358, %v801
      %v1392 = vsel %vm1383, %v1359, %v803
      %v1393 = vsel %vm1383, %v1360, %v805
      %v1394 = vsel %vm1383, %v1361, %v807
      %v1395 = vsel %vm1383, %v1362, %v809
      %v1396 = vsel %vm1383, %v1363, %v811
      %v1397 = vsel %vm1383, %v1364, %v813
      %v1398 = vsel %vm1383, %v1365, %v815
      %v1399 = vsel %vm1383, %v1366, %v817
      %v1400 = vsel %vm1383, %v1367, %v819
      %v1401 = vsel %vm1383, %v1368, %v821
      %v1402 = vsel %vm1383, %v1369, %v823
      %v1403 = vsel %vm1383, %v1370, %v825
      %v1404 = vsel %vm1383, %v1371, %v827
      %v1405 = vsel %vm1383, %v1372, %v829
      %v1406 = vsel %vm1383, %v1373, %v831
      %v1407 = vsel %vm1383, %v1374, %v833
      %v1408 = vsel %vm1383, %v1375, %v835
      %v1409 = vsel %vm1383, %v1376, %v837
      %v1410 = vsel %vm1383, %v1377, %v839
      %v1411 = vsel %vm1383, %v1378, %v841
      %v1412 = vsel %vm1383, %v1379, %v843
      %v1413 = vsel %vm1383, %v1380, %v845
      %v1414 = vsel %vm1383, %v1381, %v847
      %v1415 = vsel %vm1383, %v1382, %v849
      %vm1416 = vcmask 162816
      %v1417 = vsel %vm1416, %v1384, %v888
      %v1418 = vsel %vm1416, %v1385, %v890
      %v1419 = vsel %vm1416, %v1386, %v892
      %v1420 = vsel %vm1416, %v1387, %v894
      %v1421 = vsel %vm1416, %v1388, %v896
      %v1422 = vsel %vm1416, %v1389, %v898
      %v1423 = vsel %vm1416, %v1390, %v900
      %v1424 = vsel %vm1416, %v1391, %v902
      %v1425 = vsel %vm1416, %v1392, %v904
      %v1426 = vsel %vm1416, %v1393, %v906
      %v1427 = vsel %vm1416, %v1394, %v908
      %v1428 = vsel %vm1416, %v1395, %v910
      %v1429 = vsel %vm1416, %v1396, %v912
      %v1430 = vsel %vm1416, %v1397, %v914
      %v1431 = vsel %vm1416, %v1398, %v916
      %v1432 = vsel %vm1416, %v1399, %v918
      %v1433 = vsel %vm1416, %v1400, %v920
      %v1434 = vsel %vm1416, %v1401, %v922
      %v1435 = vsel %vm1416, %v1402, %v924
      %v1436 = vsel %vm1416, %v1403, %v926
      %v1437 = vsel %vm1416, %v1404, %v928
      %v1438 = vsel %vm1416, %v1405, %v930
      %v1439 = vsel %vm1416, %v1406, %v932
      %v1440 = vsel %vm1416, %v1407, %v934
      %v1441 = vsel %vm1416, %v1408, %v936
      %v1442 = vsel %vm1416, %v1409, %v938
      %v1443 = vsel %vm1416, %v1410, %v940
      %v1444 = vsel %vm1416, %v1411, %v942
      %v1445 = vsel %vm1416, %v1412, %v944
      %v1446 = vsel %vm1416, %v1413, %v946
      %v1447 = vsel %vm1416, %v1414, %v948
      %v1448 = vsel %vm1416, %v1415, %v950
      %vm1449 = vcmask 195584
      %v1450 = vsel %vm1449, %v1417, %v986
      %v1451 = vsel %vm1449, %v1418, %v988
      %v1452 = vsel %vm1449, %v1419, %v990
      %v1453 = vsel %vm1449, %v1420, %v992
      %v1454 = vsel %vm1449, %v1421, %v994
      %v1455 = vsel %vm1449, %v1422, %v996
      %v1456 = vsel %vm1449, %v1423, %v998
      %v1457 = vsel %vm1449, %v1424, %v1000
      %v1458 = vsel %vm1449, %v1425, %v1002
      %v1459 = vsel %vm1449, %v1426, %v1004
      %v1460 = vsel %vm1449, %v1427, %v1006
      %v1461 = vsel %vm1449, %v1428, %v1008
      %v1462 = vsel %vm1449, %v1429, %v1010
      %v1463 = vsel %vm1449, %v1430, %v1012
      %v1464 = vsel %vm1449, %v1431, %v1014
      %v1465 = vsel %vm1449, %v1432, %v1016
      %v1466 = vsel %vm1449, %v1433, %v1018
      %v1467 = vsel %vm1449, %v1434, %v1020
      %v1468 = vsel %vm1449, %v1435, %v1022
      %v1469 = vsel %vm1449, %v1436, %v1024
      %v1470 = vsel %vm1449, %v1437, %v1026
      %v1471 = vsel %vm1449, %v1438, %v1028
      %v1472 = vsel %vm1449, %v1439, %v1030
      %v1473 = vsel %vm1449, %v1440, %v1032
      %v1474 = vsel %vm1449, %v1441, %v1034
      %v1475 = vsel %vm1449, %v1442, %v1036
      %v1476 = vsel %vm1449, %v1443, %v1038
      %v1477 = vsel %vm1449, %v1444, %v1040
      %v1478 = vsel %vm1449, %v1445, %v1042
      %v1479 = vsel %vm1449, %v1446, %v1044
      %v1480 = vsel %vm1449, %v1447, %v1046
      %v1481 = vsel %vm1449, %v1448, %v1048
      %vm1482 = vcmask 228352
      %v1483 = vsel %vm1482, %v1450, %v1088
      %v1484 = vsel %vm1482, %v1451, %v1090
      %v1485 = vsel %vm1482, %v1452, %v1092
      %v1486 = vsel %vm1482, %v1453, %v1094
      %v1487 = vsel %vm1482, %v1454, %v1096
      %v1488 = vsel %vm1482, %v1455, %v1098
      %v1489 = vsel %vm1482, %v1456, %v1100
      %v1490 = vsel %vm1482, %v1457, %v1102
      %v1491 = vsel %vm1482, %v1458, %v1104
      %v1492 = vsel %vm1482, %v1459, %v1106
      %v1493 = vsel %vm1482, %v1460, %v1108
      %v1494 = vsel %vm1482, %v1461, %v1110
      %v1495 = vsel %vm1482, %v1462, %v1112
      %v1496 = vsel %vm1482, %v1463, %v1114
      %v1497 = vsel %vm1482, %v1464, %v1116
      %v1498 = vsel %vm1482, %v1465, %v1118
      %v1499 = vsel %vm1482, %v1466, %v1120
      %v1500 = vsel %vm1482, %v1467, %v1122
      %v1501 = vsel %vm1482, %v1468, %v1124
      %v1502 = vsel %vm1482, %v1469, %v1126
      %v1503 = vsel %vm1482, %v1470, %v1128
      %v1504 = vsel %vm1482, %v1471, %v1130
      %v1505 = vsel %vm1482, %v1472, %v1132
      %v1506 = vsel %vm1482, %v1473, %v1134
      %v1507 = vsel %vm1482, %v1474, %v1136
      %v1508 = vsel %vm1482, %v1475, %v1138
      %v1509 = vsel %vm1482, %v1476, %v1140
      %v1510 = vsel %vm1482, %v1477, %v1142
      %v1511 = vsel %vm1482, %v1478, %v1144
      %v1512 = vsel %vm1482, %v1479, %v1146
      %v1513 = vsel %vm1482, %v1480, %v1148
      %v1514 = vsel %vm1482, %v1481, %v1150
      %vm1515 = vcmask 261120
      %v1516 = vsel %vm1515, %v1483, %v1189
      %v1517 = vsel %vm1515, %v1484, %v1191
      %v1518 = vsel %vm1515, %v1485, %v1193
      %v1519 = vsel %vm1515, %v1486, %v1195
      %v1520 = vsel %vm1515, %v1487, %v1197
      %v1521 = vsel %vm1515, %v1488, %v1199
      %v1522 = vsel %vm1515, %v1489, %v1201
      %v1523 = vsel %vm1515, %v1490, %v1203
      %v1524 = vsel %vm1515, %v1491, %v1205
      %v1525 = vsel %vm1515, %v1492, %v1207
      %v1526 = vsel %vm1515, %v1493, %v1209
      %v1527 = vsel %vm1515, %v1494, %v1211
      %v1528 = vsel %vm1515, %v1495, %v1213
      %v1529 = vsel %vm1515, %v1496, %v1215
      %v1530 = vsel %vm1515, %v1497, %v1217
      %v1531 = vsel %vm1515, %v1498, %v1219
      %v1532 = vsel %vm1515, %v1499, %v1221
      %v1533 = vsel %vm1515, %v1500, %v1223
      %v1534 = vsel %vm1515, %v1501, %v1225
      %v1535 = vsel %vm1515, %v1502, %v1227
      %v1536 = vsel %vm1515, %v1503, %v1229
      %v1537 = vsel %vm1515, %v1504, %v1231
      %v1538 = vsel %vm1515, %v1505, %v1233
      %v1539 = vsel %vm1515, %v1506, %v1235
      %v1540 = vsel %vm1515, %v1507, %v1237
      %v1541 = vsel %vm1515, %v1508, %v1239
      %v1542 = vsel %vm1515, %v1509, %v1241
      %v1543 = vsel %vm1515, %v1510, %v1243
      %v1544 = vsel %vm1515, %v1511, %v1245
      %v1545 = vsel %vm1515, %v1512, %v1247
      %v1546 = vsel %vm1515, %v1513, %v1249
      %v1547 = vsel %vm1515, %v1514, %v1251
      %v1548 = vpack.c.bf16 %v1517, %v1516
      %v1549 = vpack.c.bf16 %v1519, %v1518
      %v1550 = vpack.c.bf16 %v1521, %v1520
      %v1551 = vpack.c.bf16 %v1523, %v1522
      %v1552 = vpack.c.bf16 %v1525, %v1524
      %v1553 = vpack.c.bf16 %v1527, %v1526
      %v1554 = vpack.c.bf16 %v1529, %v1528
      %v1555 = vpack.c.bf16 %v1531, %v1530
      %v1556 = vpack.c.bf16 %v1533, %v1532
      %v1557 = vpack.c.bf16 %v1535, %v1534
      %v1558 = vpack.c.bf16 %v1537, %v1536
      %v1559 = vpack.c.bf16 %v1539, %v1538
      %v1560 = vpack.c.bf16 %v1541, %v1540
      %v1561 = vpack.c.bf16 %v1543, %v1542
      %v1562 = vpack.c.bf16 %v1545, %v1544
      %v1563 = vpack.c.bf16 %v1547, %v1546
      %v1564 = vld [vmem:[%s1] sm:$0xf]
      %v1565 = vld [vmem:[%s1 + $0x4] sm:$0xf]
      %v1566 = vld [vmem:[%s1 + $0x8] sm:$0xf]
      %v1567 = vld [vmem:[%s1 + $0xc] sm:$0xf]
      %v1568 = vld [vmem:[%s1 + $0x10] sm:$0x3]
      %v1569 = vld [vmem:[%s2] sm:$0x1]
      %v1571 = vlaneseq
      %v1572 = vshrl.u32 %v1571, 7
      %v1573 = vsub.s32 0, %v1572
      %v1574 = vrot.slane %v1569, %v1573
      %v1581 = vunpack.c.l.b16 %v1564
      %v1582 = vunpack.c.l.b16 %v1565
      %v1583 = vunpack.c.l.b16 %v1566
      %v1584 = vunpack.c.l.b16 %v1567
      %v1585 = vunpack.c.l.b16 %v1568
      %v1586 = vpack.c.b16 %v1582, %v1581
      %v1587 = vpack.c.b16 %v1584, %v1583
      %v1588 = vpack.c.b16 %v1585, %v1585
      %vm1591 = vcmask 293888
      %v1593 = vsel %vm1591, %v1548, 0
      %v1596 = vsel %vm1591, %v1549, 0
      %v1599 = vsel %vm1591, %v1550, 0
      %v1602 = vsel %vm1591, %v1551, 0
      %v1605 = vsel %vm1591, %v1552, 0
      %v1608 = vsel %vm1591, %v1553, 0
      %v1611 = vsel %vm1591, %v1554, 0
      %v1614 = vsel %vm1591, %v1555, 0
      %v1617 = vsel %vm1591, %v1556, 0
      %v1620 = vsel %vm1591, %v1557, 0
      %v1623 = vsel %vm1591, %v1558, 0
      %v1626 = vsel %vm1591, %v1559, 0
      %v1629 = vsel %vm1591, %v1560, 0
      %v1632 = vsel %vm1591, %v1561, 0
      %v1635 = vsel %vm1591, %v1562, 0
      %v1638 = vsel %vm1591, %v1563, 0
      %vm1640 = vcmask 1041408
      %v1642 = vsel %vm1640, %v1588, 0
      %1644 = vmatprep.subr.bf16.mxu0 0
      %1645 = vmatpush1.bf16.msra.mxu0 %v1586
      %1646 = vmatprep.subr.bf16.mxu0 0
      %1647 = vmatpush1.bf16.msra.mxu0 %v1587
      %1648 = vmatprep.subr.bf16.mxu0 0
      %1649 = vmatpush1.bf16.msra.mxu0 %v1642
      %1650 = vmatprep.subr.bf16.mxu0 0
      %1651 = vmatpush1.bf16.msra.mxu0 0
      %1652 = vmatprep.subr.bf16.mxu0 0
      %1653 = vmatpush1.bf16.msra.mxu0 0
      %1654 = vmatprep.subr.bf16.mxu0 0
      %1655 = vmatpush1.bf16.msra.mxu0 0
      %1656 = vmatprep.subr.bf16.mxu0 0
      %1657 = vmatpush1.bf16.msra.mxu0 0
      %1658 = vmatprep.subr.bf16.mxu0 0
      %1659 = vmatpush1.bf16.msra.mxu0 0
      %1660 = vmatprep.subr.bf16.mxu0 0
      %1661 = vmatpush1.bf16.msra.mxu0 0
      %1662 = vmatprep.subr.bf16.mxu0 0
      %1663 = vmatpush1.bf16.msra.mxu0 0
      %1664 = vmatprep.subr.bf16.mxu0 0
      %1665 = vmatpush1.bf16.msra.mxu0 0
      %1666 = vmatprep.subr.bf16.mxu0 0
      %1667 = vmatpush1.bf16.msra.mxu0 0
      %1668 = vmatprep.subr.bf16.mxu0 0
      %1669 = vmatpush1.bf16.msra.mxu0 0
      %1670 = vmatprep.subr.bf16.mxu0 0
      %1671 = vmatpush1.bf16.msra.mxu0 0
      %1672 = vmatprep.subr.bf16.mxu0 0
      %1673 = vmatpush1.bf16.msra.mxu0 0
      %1674 = vmatprep.subr.bf16.mxu0 0
      %1675 = vmatpush1.bf16.msra.mxu0 0
      %1676 = vmatprep.mubr.bf16.mxu0 0
      %1677 = vmatmul.mubr.bf16.gmra.mrb[0].mxu0 %v1593
      %v1678 = vpop.f32.mrb[0].mxu0
      %v1679 = vadd.f32 %v1574, %v1678
      %v1680 = vpop.f32.mrb[0].mxu0
      %v1681 = vpop.f32.mrb[0].mxu0
      %v1682 = vadd.f32 %v1574, %v1681
      %v1683 = vpop.f32.mrb[0].mxu0
      %1684 = vmatprep.mubr.bf16.mxu0 0
      %1685 = vmatmul.mubr.bf16.gmra.mrb[0].mxu0 %v1596
      %v1686 = vpop.f32.mrb[0].mxu0
      %v1687 = vadd.f32 %v1574, %v1686
      %v1688 = vpop.f32.mrb[0].mxu0
      %v1689 = vpop.f32.mrb[0].mxu0
      %v1690 = vadd.f32 %v1574, %v1689
      %v1691 = vpop.f32.mrb[0].mxu0
      %1692 = vmatprep.mubr.bf16.mxu0 0
      %1693 = vmatmul.mubr.bf16.gmra.mrb[0].mxu0 %v1599
      %v1694 = vpop.f32.mrb[0].mxu0
      %v1695 = vadd.f32 %v1574, %v1694
      %v1696 = vpop.f32.mrb[0].mxu0
      %v1697 = vpop.f32.mrb[0].mxu0
      %v1698 = vadd.f32 %v1574, %v1697
      %v1699 = vpop.f32.mrb[0].mxu0
      %1700 = vmatprep.mubr.bf16.mxu0 0
      %1701 = vmatmul.mubr.bf16.gmra.mrb[0].mxu0 %v1602
      %v1702 = vpop.f32.mrb[0].mxu0
      %v1703 = vadd.f32 %v1574, %v1702
      %v1704 = vpop.f32.mrb[0].mxu0
      %v1705 = vpop.f32.mrb[0].mxu0
      %v1706 = vadd.f32 %v1574, %v1705
      %v1707 = vpop.f32.mrb[0].mxu0
      %1708 = vmatprep.mubr.bf16.mxu0 0
      %1709 = vmatmul.mubr.bf16.gmra.mrb[0].mxu0 %v1605
      %v1710 = vpop.f32.mrb[0].mxu0
      %v1711 = vadd.f32 %v1574, %v1710
      %v1712 = vpop.f32.mrb[0].mxu0
      %v1713 = vpop.f32.mrb[0].mxu0
      %v1714 = vadd.f32 %v1574, %v1713
      %v1715 = vpop.f32.mrb[0].mxu0
      %1716 = vmatprep.mubr.bf16.mxu0 0
      %1717 = vmatmul.mubr.bf16.gmra.mrb[0].mxu0 %v1608
      %v1718 = vpop.f32.mrb[0].mxu0
      %v1719 = vadd.f32 %v1574, %v1718
      %v1720 = vpop.f32.mrb[0].mxu0
      %v1721 = vpop.f32.mrb[0].mxu0
      %v1722 = vadd.f32 %v1574, %v1721
      %v1723 = vpop.f32.mrb[0].mxu0
      %1724 = vmatprep.mubr.bf16.mxu0 0
      %1725 = vmatmul.mubr.bf16.gmra.mrb[0].mxu0 %v1611
      %v1726 = vpop.f32.mrb[0].mxu0
      %v1727 = vadd.f32 %v1574, %v1726
      %v1728 = vpop.f32.mrb[0].mxu0
      %v1729 = vpop.f32.mrb[0].mxu0
      %v1730 = vadd.f32 %v1574, %v1729
      %v1731 = vpop.f32.mrb[0].mxu0
      %1732 = vmatprep.mubr.bf16.mxu0 0
      %1733 = vmatmul.mubr.bf16.gmra.mrb[0].mxu0 %v1614
      %v1734 = vpop.f32.mrb[0].mxu0
      %v1735 = vadd.f32 %v1574, %v1734
      %v1736 = vpop.f32.mrb[0].mxu0
      %v1737 = vpop.f32.mrb[0].mxu0
      %v1738 = vadd.f32 %v1574, %v1737
      %v1739 = vpop.f32.mrb[0].mxu0
      %1740 = vmatprep.mubr.bf16.mxu0 0
      %1741 = vmatmul.mubr.bf16.gmra.mrb[0].mxu0 %v1617
      %v1742 = vpop.f32.mrb[0].mxu0
      %v1743 = vadd.f32 %v1574, %v1742
      %v1744 = vpop.f32.mrb[0].mxu0
      %v1745 = vpop.f32.mrb[0].mxu0
      %v1746 = vadd.f32 %v1574, %v1745
      %v1747 = vpop.f32.mrb[0].mxu0
      %1748 = vmatprep.mubr.bf16.mxu0 0
      %1749 = vmatmul.mubr.bf16.gmra.mrb[0].mxu0 %v1620
      %v1750 = vpop.f32.mrb[0].mxu0
      %v1751 = vadd.f32 %v1574, %v1750
      %v1752 = vpop.f32.mrb[0].mxu0
      %v1753 = vpop.f32.mrb[0].mxu0
      %v1754 = vadd.f32 %v1574, %v1753
      %v1755 = vpop.f32.mrb[0].mxu0
      %1756 = vmatprep.mubr.bf16.mxu0 0
      %1757 = vmatmul.mubr.bf16.gmra.mrb[0].mxu0 %v1623
      %v1758 = vpop.f32.mrb[0].mxu0
      %v1759 = vadd.f32 %v1574, %v1758
      %v1760 = vpop.f32.mrb[0].mxu0
      %v1761 = vpop.f32.mrb[0].mxu0
      %v1762 = vadd.f32 %v1574, %v1761
      %v1763 = vpop.f32.mrb[0].mxu0
      %1764 = vmatprep.mubr.bf16.mxu0 0
      %1765 = vmatmul.mubr.bf16.gmra.mrb[0].mxu0 %v1626
      %v1766 = vpop.f32.mrb[0].mxu0
      %v1767 = vadd.f32 %v1574, %v1766
      %v1768 = vpop.f32.mrb[0].mxu0
      %v1769 = vpop.f32.mrb[0].mxu0
      %v1770 = vadd.f32 %v1574, %v1769
      %v1771 = vpop.f32.mrb[0].mxu0
      %1772 = vmatprep.mubr.bf16.mxu0 0
      %1773 = vmatmul.mubr.bf16.gmra.mrb[0].mxu0 %v1629
      %v1774 = vpop.f32.mrb[0].mxu0
      %v1775 = vadd.f32 %v1574, %v1774
      %v1776 = vpop.f32.mrb[0].mxu0
      %v1777 = vpop.f32.mrb[0].mxu0
      %v1778 = vadd.f32 %v1574, %v1777
      %v1779 = vpop.f32.mrb[0].mxu0
      %1780 = vmatprep.mubr.bf16.mxu0 0
      %1781 = vmatmul.mubr.bf16.gmra.mrb[0].mxu0 %v1632
      %v1782 = vpop.f32.mrb[0].mxu0
      %v1783 = vadd.f32 %v1574, %v1782
      %v1784 = vpop.f32.mrb[0].mxu0
      %v1785 = vpop.f32.mrb[0].mxu0
      %v1786 = vadd.f32 %v1574, %v1785
      %v1787 = vpop.f32.mrb[0].mxu0
      %1788 = vmatprep.mubr.bf16.mxu0 0
      %1789 = vmatmul.mubr.bf16.gmra.mrb[0].mxu0 %v1635
      %v1790 = vpop.f32.mrb[0].mxu0
      %v1791 = vadd.f32 %v1574, %v1790
      %v1792 = vpop.f32.mrb[0].mxu0
      %v1793 = vpop.f32.mrb[0].mxu0
      %v1794 = vadd.f32 %v1574, %v1793
      %v1795 = vpop.f32.mrb[0].mxu0
      %1796 = vmatprep.mubr.bf16.mxu0 0
      %1797 = vmatmul.mubr.bf16.gmra.mrb[0].mxu0 %v1638
      %v1798 = vpop.f32.mrb[0].mxu0
      %v1799 = vadd.f32 %v1574, %v1798
      %v1800 = vpop.f32.mrb[0].mxu0
      %v1801 = vpop.f32.mrb[0].mxu0
      %v1802 = vadd.f32 %v1574, %v1801
      %v1803 = vpop.f32.mrb[0].mxu0
      %1804 = vdwg.mxu0
      %v1805 = vmax.f32 %v1679, 0.0
      %v1806 = vmax.f32 %v1682, 0.0
      %v1807 = vmax.f32 %v1687, 0.0
      %v1808 = vmax.f32 %v1690, 0.0
      %v1809 = vmax.f32 %v1695, 0.0
      %v1810 = vmax.f32 %v1698, 0.0
      %v1811 = vmax.f32 %v1703, 0.0
      %v1812 = vmax.f32 %v1706, 0.0
      %v1813 = vmax.f32 %v1711, 0.0
      %v1814 = vmax.f32 %v1714, 0.0
      %v1815 = vmax.f32 %v1719, 0.0
      %v1816 = vmax.f32 %v1722, 0.0
      %v1817 = vmax.f32 %v1727, 0.0
      %v1818 = vmax.f32 %v1730, 0.0
      %v1819 = vmax.f32 %v1735, 0.0
      %v1820 = vmax.f32 %v1738, 0.0
      %v1821 = vmax.f32 %v1743, 0.0
      %v1822 = vmax.f32 %v1746, 0.0
      %v1823 = vmax.f32 %v1751, 0.0
      %v1824 = vmax.f32 %v1754, 0.0
      %v1825 = vmax.f32 %v1759, 0.0
      %v1826 = vmax.f32 %v1762, 0.0
      %v1827 = vmax.f32 %v1767, 0.0
      %v1828 = vmax.f32 %v1770, 0.0
      %v1829 = vmax.f32 %v1775, 0.0
      %v1830 = vmax.f32 %v1778, 0.0
      %v1831 = vmax.f32 %v1783, 0.0
      %v1832 = vmax.f32 %v1786, 0.0
      %v1833 = vmax.f32 %v1791, 0.0
      %v1834 = vmax.f32 %v1794, 0.0
      %v1835 = vmax.f32 %v1799, 0.0
      %v1836 = vmax.f32 %v1802, 0.0
      %v1869 = vrot.slane %v1805, 1
      %v1870 = vrot.slane %v1806, 1
      %v1871 = vsel %vm328, %v1869, %v1870
      %v1872 = vrot.slane %v1807, 1
      %v1873 = vrot.slane %v1808, 1
      %v1874 = vsel %vm328, %v1872, %v1873
      %v1875 = vrot.slane %v1809, 1
      %v1876 = vrot.slane %v1810, 1
      %v1877 = vsel %vm328, %v1875, %v1876
      %v1878 = vrot.slane %v1811, 1
      %v1879 = vrot.slane %v1812, 1
      %v1880 = vsel %vm328, %v1878, %v1879
      %v1881 = vrot.slane %v1813, 1
      %v1882 = vrot.slane %v1814, 1
      %v1883 = vsel %vm328, %v1881, %v1882
      %v1884 = vrot.slane %v1815, 1
      %v1885 = vrot.slane %v1816, 1
      %v1886 = vsel %vm328, %v1884, %v1885
      %v1887 = vrot.slane %v1817, 1
      %v1888 = vrot.slane %v1818, 1
      %v1889 = vsel %vm328, %v1887, %v1888
      %v1890 = vrot.slane %v1819, 1
      %v1891 = vrot.slane %v1820, 1
      %v1892 = vsel %vm328, %v1890, %v1891
      %v1893 = vrot.slane %v1821, 1
      %v1894 = vrot.slane %v1822, 1
      %v1895 = vsel %vm328, %v1893, %v1894
      %v1896 = vrot.slane %v1823, 1
      %v1897 = vrot.slane %v1824, 1
      %v1898 = vsel %vm328, %v1896, %v1897
      %v1899 = vrot.slane %v1825, 1
      %v1900 = vrot.slane %v1826, 1
      %v1901 = vsel %vm328, %v1899, %v1900
      %v1902 = vrot.slane %v1827, 1
      %v1903 = vrot.slane %v1828, 1
      %v1904 = vsel %vm328, %v1902, %v1903
      %v1905 = vrot.slane %v1829, 1
      %v1906 = vrot.slane %v1830, 1
      %v1907 = vsel %vm328, %v1905, %v1906
      %v1908 = vrot.slane %v1831, 1
      %v1909 = vrot.slane %v1832, 1
      %v1910 = vsel %vm328, %v1908, %v1909
      %v1911 = vrot.slane %v1833, 1
      %v1912 = vrot.slane %v1834, 1
      %v1913 = vsel %vm328, %v1911, %v1912
      %v1914 = vrot.slane %v1835, 1
      %v1915 = vrot.slane %v1836, 1
      %v1916 = vsel %vm328, %v1914, %v1915
      %v1933 = vsel %vm328, %v1870, 0.0
      %v1934 = vsel %vm328, %v1873, 0.0
      %v1935 = vsel %vm328, %v1876, 0.0
      %v1936 = vsel %vm328, %v1879, 0.0
      %v1937 = vsel %vm328, %v1882, 0.0
      %v1938 = vsel %vm328, %v1885, 0.0
      %v1939 = vsel %vm328, %v1888, 0.0
      %v1940 = vsel %vm328, %v1891, 0.0
      %v1941 = vsel %vm328, %v1894, 0.0
      %v1942 = vsel %vm328, %v1897, 0.0
      %v1943 = vsel %vm328, %v1900, 0.0
      %v1944 = vsel %vm328, %v1903, 0.0
      %v1945 = vsel %vm328, %v1906, 0.0
      %v1946 = vsel %vm328, %v1909, 0.0
      %v1947 = vsel %vm328, %v1912, 0.0
      %v1948 = vsel %vm328, %v1915, 0.0
      %v1950 = vrot.slane 0.0, 1
      %v1951 = vsel %vm328, %v1950, %v1950
      %v1953 = vsel %vm328, %v1950, 0.0
      %1970 = vrot.lane.b32.xlu0 %v1871, 8
      %v1971 = vpop.permute.xlu0 %1970
      %1972 = vrot.lane.b32.xlu0 %v1933, 8
      %v1973 = vpop.permute.xlu0 %1972
      %1974 = vrot.lane.b32.xlu0 %v1874, 8
      %v1975 = vpop.permute.xlu0 %1974
      %1976 = vrot.lane.b32.xlu0 %v1934, 8
      %v1977 = vpop.permute.xlu0 %1976
      %1978 = vrot.lane.b32.xlu0 %v1877, 8
      %v1979 = vpop.permute.xlu0 %1978
      %1980 = vrot.lane.b32.xlu0 %v1935, 8
      %v1981 = vpop.permute.xlu0 %1980
      %1982 = vrot.lane.b32.xlu0 %v1880, 8
      %v1983 = vpop.permute.xlu0 %1982
      %1984 = vrot.lane.b32.xlu0 %v1936, 8
      %v1985 = vpop.permute.xlu0 %1984
      %1986 = vrot.lane.b32.xlu0 %v1883, 8
      %v1987 = vpop.permute.xlu0 %1986
      %1988 = vrot.lane.b32.xlu0 %v1937, 8
      %v1989 = vpop.permute.xlu0 %1988
      %1990 = vrot.lane.b32.xlu0 %v1886, 8
      %v1991 = vpop.permute.xlu0 %1990
      %1992 = vrot.lane.b32.xlu0 %v1938, 8
      %v1993 = vpop.permute.xlu0 %1992
      %1994 = vrot.lane.b32.xlu0 %v1889, 8
      %v1995 = vpop.permute.xlu0 %1994
      %1996 = vrot.lane.b32.xlu0 %v1939, 8
      %v1997 = vpop.permute.xlu0 %1996
      %1998 = vrot.lane.b32.xlu0 %v1892, 8
      %v1999 = vpop.permute.xlu0 %1998
      %2000 = vrot.lane.b32.xlu0 %v1940, 8
      %v2001 = vpop.permute.xlu0 %2000
      %2002 = vrot.lane.b32.xlu0 %v1895, 8
      %v2003 = vpop.permute.xlu0 %2002
      %2004 = vrot.lane.b32.xlu0 %v1941, 8
      %v2005 = vpop.permute.xlu0 %2004
      %2006 = vrot.lane.b32.xlu0 %v1898, 8
      %v2007 = vpop.permute.xlu0 %2006
      %2008 = vrot.lane.b32.xlu0 %v1942, 8
      %v2009 = vpop.permute.xlu0 %2008
      %2010 = vrot.lane.b32.xlu0 %v1901, 8
      %v2011 = vpop.permute.xlu0 %2010
      %2012 = vrot.lane.b32.xlu0 %v1943, 8
      %v2013 = vpop.permute.xlu0 %2012
      %2014 = vrot.lane.b32.xlu0 %v1904, 8
      %v2015 = vpop.permute.xlu0 %2014
      %2016 = vrot.lane.b32.xlu0 %v1944, 8
      %v2017 = vpop.permute.xlu0 %2016
      %2018 = vrot.lane.b32.xlu0 %v1907, 8
      %v2019 = vpop.permute.xlu0 %2018
      %2020 = vrot.lane.b32.xlu0 %v1945, 8
      %v2021 = vpop.permute.xlu0 %2020
      %2022 = vrot.lane.b32.xlu0 %v1910, 8
      %v2023 = vpop.permute.xlu0 %2022
      %2024 = vrot.lane.b32.xlu0 %v1946, 8
      %v2025 = vpop.permute.xlu0 %2024
      %2026 = vrot.lane.b32.xlu0 %v1913, 8
      %v2027 = vpop.permute.xlu0 %2026
      %2028 = vrot.lane.b32.xlu0 %v1947, 8
      %v2029 = vpop.permute.xlu0 %2028
      %2030 = vrot.lane.b32.xlu0 %v1916, 8
      %v2031 = vpop.permute.xlu0 %2030
      %2032 = vrot.lane.b32.xlu0 %v1948, 8
      %v2033 = vpop.permute.xlu0 %2032
      %2066 = vrot.lane.b32.xlu0 %v1807, 16
      %v2067 = vpop.permute.xlu0 %2066
      %2068 = vrot.lane.b32.xlu0 %v1808, 16
      %v2069 = vpop.permute.xlu0 %2068
      %2070 = vrot.lane.b32.xlu0 %v1809, 16
      %v2071 = vpop.permute.xlu0 %2070
      %2072 = vrot.lane.b32.xlu0 %v1810, 16
      %v2073 = vpop.permute.xlu0 %2072
      %2074 = vrot.lane.b32.xlu0 %v1811, 16
      %v2075 = vpop.permute.xlu0 %2074
      %2076 = vrot.lane.b32.xlu0 %v1812, 16
      %v2077 = vpop.permute.xlu0 %2076
      %2078 = vrot.lane.b32.xlu0 %v1813, 16
      %v2079 = vpop.permute.xlu0 %2078
      %2080 = vrot.lane.b32.xlu0 %v1814, 16
      %v2081 = vpop.permute.xlu0 %2080
      %2082 = vrot.lane.b32.xlu0 %v1815, 16
      %v2083 = vpop.permute.xlu0 %2082
      %2084 = vrot.lane.b32.xlu0 %v1816, 16
      %v2085 = vpop.permute.xlu0 %2084
      %2086 = vrot.lane.b32.xlu0 %v1817, 16
      %v2087 = vpop.permute.xlu0 %2086
      %2088 = vrot.lane.b32.xlu0 %v1818, 16
      %v2089 = vpop.permute.xlu0 %2088
      %2090 = vrot.lane.b32.xlu0 %v1819, 16
      %v2091 = vpop.permute.xlu0 %2090
      %2092 = vrot.lane.b32.xlu0 %v1820, 16
      %v2093 = vpop.permute.xlu0 %2092
      %2094 = vrot.lane.b32.xlu0 %v1821, 16
      %v2095 = vpop.permute.xlu0 %2094
      %2096 = vrot.lane.b32.xlu0 %v1822, 16
      %v2097 = vpop.permute.xlu0 %2096
      %2098 = vrot.lane.b32.xlu0 %v1823, 16
      %v2099 = vpop.permute.xlu0 %2098
      %2100 = vrot.lane.b32.xlu0 %v1824, 16
      %v2101 = vpop.permute.xlu0 %2100
      %2102 = vrot.lane.b32.xlu0 %v1825, 16
      %v2103 = vpop.permute.xlu0 %2102
      %2104 = vrot.lane.b32.xlu0 %v1826, 16
      %v2105 = vpop.permute.xlu0 %2104
      %2106 = vrot.lane.b32.xlu0 %v1827, 16
      %v2107 = vpop.permute.xlu0 %2106
      %2108 = vrot.lane.b32.xlu0 %v1828, 16
      %v2109 = vpop.permute.xlu0 %2108
      %2110 = vrot.lane.b32.xlu0 %v1829, 16
      %v2111 = vpop.permute.xlu0 %2110
      %2112 = vrot.lane.b32.xlu0 %v1830, 16
      %v2113 = vpop.permute.xlu0 %2112
      %2114 = vrot.lane.b32.xlu0 %v1831, 16
      %v2115 = vpop.permute.xlu0 %2114
      %2116 = vrot.lane.b32.xlu0 %v1832, 16
      %v2117 = vpop.permute.xlu0 %2116
      %2118 = vrot.lane.b32.xlu0 %v1833, 16
      %v2119 = vpop.permute.xlu0 %2118
      %2120 = vrot.lane.b32.xlu0 %v1834, 16
      %v2121 = vpop.permute.xlu0 %2120
      %2122 = vrot.lane.b32.xlu0 %v1835, 16
      %v2123 = vpop.permute.xlu0 %2122
      %2124 = vrot.lane.b32.xlu0 %v1836, 16
      %v2125 = vpop.permute.xlu0 %2124
      %2126 = vrot.lane.b32.xlu0 0.0, 16
      %v2127 = vpop.permute.xlu0 %2126
      %2160 = vrot.lane.b32.xlu0 %v1874, 24
      %v2161 = vpop.permute.xlu0 %2160
      %2162 = vrot.lane.b32.xlu0 %v1934, 24
      %v2163 = vpop.permute.xlu0 %2162
      %2164 = vrot.lane.b32.xlu0 %v1877, 24
      %v2165 = vpop.permute.xlu0 %2164
      %2166 = vrot.lane.b32.xlu0 %v1935, 24
      %v2167 = vpop.permute.xlu0 %2166
      %2168 = vrot.lane.b32.xlu0 %v1880, 24
      %v2169 = vpop.permute.xlu0 %2168
      %2170 = vrot.lane.b32.xlu0 %v1936, 24
      %v2171 = vpop.permute.xlu0 %2170
      %2172 = vrot.lane.b32.xlu0 %v1883, 24
      %v2173 = vpop.permute.xlu0 %2172
      %2174 = vrot.lane.b32.xlu0 %v1937, 24
      %v2175 = vpop.permute.xlu0 %2174
      %2176 = vrot.lane.b32.xlu0 %v1886, 24
      %v2177 = vpop.permute.xlu0 %2176
      %2178 = vrot.lane.b32.xlu0 %v1938, 24
      %v2179 = vpop.permute.xlu0 %2178
      %2180 = vrot.lane.b32.xlu0 %v1889, 24
      %v2181 = vpop.permute.xlu0 %2180
      %2182 = vrot.lane.b32.xlu0 %v1939, 24
      %v2183 = vpop.permute.xlu0 %2182
      %2184 = vrot.lane.b32.xlu0 %v1892, 24
      %v2185 = vpop.permute.xlu0 %2184
      %2186 = vrot.lane.b32.xlu0 %v1940, 24
      %v2187 = vpop.permute.xlu0 %2186
      %2188 = vrot.lane.b32.xlu0 %v1895, 24
      %v2189 = vpop.permute.xlu0 %2188
      %2190 = vrot.lane.b32.xlu0 %v1941, 24
      %v2191 = vpop.permute.xlu0 %2190
      %2192 = vrot.lane.b32.xlu0 %v1898, 24
      %v2193 = vpop.permute.xlu0 %2192
      %2194 = vrot.lane.b32.xlu0 %v1942, 24
      %v2195 = vpop.permute.xlu0 %2194
      %2196 = vrot.lane.b32.xlu0 %v1901, 24
      %v2197 = vpop.permute.xlu0 %2196
      %2198 = vrot.lane.b32.xlu0 %v1943, 24
      %v2199 = vpop.permute.xlu0 %2198
      %2200 = vrot.lane.b32.xlu0 %v1904, 24
      %v2201 = vpop.permute.xlu0 %2200
      %2202 = vrot.lane.b32.xlu0 %v1944, 24
      %v2203 = vpop.permute.xlu0 %2202
      %2204 = vrot.lane.b32.xlu0 %v1907, 24
      %v2205 = vpop.permute.xlu0 %2204
      %2206 = vrot.lane.b32.xlu0 %v1945, 24
      %v2207 = vpop.permute.xlu0 %2206
      %2208 = vrot.lane.b32.xlu0 %v1910, 24
      %v2209 = vpop.permute.xlu0 %2208
      %2210 = vrot.lane.b32.xlu0 %v1946, 24
      %v2211 = vpop.permute.xlu0 %2210
      %2212 = vrot.lane.b32.xlu0 %v1913, 24
      %v2213 = vpop.permute.xlu0 %2212
      %2214 = vrot.lane.b32.xlu0 %v1947, 24
      %v2215 = vpop.permute.xlu0 %2214
      %2216 = vrot.lane.b32.xlu0 %v1916, 24
      %v2217 = vpop.permute.xlu0 %2216
      %2218 = vrot.lane.b32.xlu0 %v1948, 24
      %v2219 = vpop.permute.xlu0 %2218
      %2220 = vrot.lane.b32.xlu0 %v1951, 24
      %v2221 = vpop.permute.xlu0 %2220
      %2222 = vrot.lane.b32.xlu0 %v1953, 24
      %v2223 = vpop.permute.xlu0 %2222
      %v2256 = vsel %vm1317, %v1805, %v1971
      %v2257 = vsel %vm1317, %v1806, %v1973
      %v2258 = vsel %vm1317, %v1807, %v1975
      %v2259 = vsel %vm1317, %v1808, %v1977
      %v2260 = vsel %vm1317, %v1809, %v1979
      %v2261 = vsel %vm1317, %v1810, %v1981
      %v2262 = vsel %vm1317, %v1811, %v1983
      %v2263 = vsel %vm1317, %v1812, %v1985
      %v2264 = vsel %vm1317, %v1813, %v1987
      %v2265 = vsel %vm1317, %v1814, %v1989
      %v2266 = vsel %vm1317, %v1815, %v1991
      %v2267 = vsel %vm1317, %v1816, %v1993
      %v2268 = vsel %vm1317, %v1817, %v1995
      %v2269 = vsel %vm1317, %v1818, %v1997
      %v2270 = vsel %vm1317, %v1819, %v1999
      %v2271 = vsel %vm1317, %v1820, %v2001
      %v2272 = vsel %vm1317, %v1821, %v2003
      %v2273 = vsel %vm1317, %v1822, %v2005
      %v2274 = vsel %vm1317, %v1823, %v2007
      %v2275 = vsel %vm1317, %v1824, %v2009
      %v2276 = vsel %vm1317, %v1825, %v2011
      %v2277 = vsel %vm1317, %v1826, %v2013
      %v2278 = vsel %vm1317, %v1827, %v2015
      %v2279 = vsel %vm1317, %v1828, %v2017
      %v2280 = vsel %vm1317, %v1829, %v2019
      %v2281 = vsel %vm1317, %v1830, %v2021
      %v2282 = vsel %vm1317, %v1831, %v2023
      %v2283 = vsel %vm1317, %v1832, %v2025
      %v2284 = vsel %vm1317, %v1833, %v2027
      %v2285 = vsel %vm1317, %v1834, %v2029
      %v2286 = vsel %vm1317, %v1835, %v2031
      %v2287 = vsel %vm1317, %v1836, %v2033
      %v2288 = vsel %vm1383, %v2256, %v2067
      %v2289 = vsel %vm1383, %v2257, %v2069
      %v2290 = vsel %vm1383, %v2258, %v2071
      %v2291 = vsel %vm1383, %v2259, %v2073
      %v2292 = vsel %vm1383, %v2260, %v2075
      %v2293 = vsel %vm1383, %v2261, %v2077
      %v2294 = vsel %vm1383, %v2262, %v2079
      %v2295 = vsel %vm1383, %v2263, %v2081
      %v2296 = vsel %vm1383, %v2264, %v2083
      %v2297 = vsel %vm1383, %v2265, %v2085
      %v2298 = vsel %vm1383, %v2266, %v2087
      %v2299 = vsel %vm1383, %v2267, %v2089
      %v2300 = vsel %vm1383, %v2268, %v2091
      %v2301 = vsel %vm1383, %v2269, %v2093
      %v2302 = vsel %vm1383, %v2270, %v2095
      %v2303 = vsel %vm1383, %v2271, %v2097
      %v2304 = vsel %vm1383, %v2272, %v2099
      %v2305 = vsel %vm1383, %v2273, %v2101
      %v2306 = vsel %vm1383, %v2274, %v2103
      %v2307 = vsel %vm1383, %v2275, %v2105
      %v2308 = vsel %vm1383, %v2276, %v2107
      %v2309 = vsel %vm1383, %v2277, %v2109
      %v2310 = vsel %vm1383, %v2278, %v2111
      %v2311 = vsel %vm1383, %v2279, %v2113
      %v2312 = vsel %vm1383, %v2280, %v2115
      %v2313 = vsel %vm1383, %v2281, %v2117
      %v2314 = vsel %vm1383, %v2282, %v2119
      %v2315 = vsel %vm1383, %v2283, %v2121
      %v2316 = vsel %vm1383, %v2284, %v2123
      %v2317 = vsel %vm1383, %v2285, %v2125
      %v2318 = vsel %vm1383, %v2286, %v2127
      %v2319 = vsel %vm1383, %v2287, %v2127
      %v2320 = vsel %vm1449, %v2288, %v2161
      %v2321 = vsel %vm1449, %v2289, %v2163
      %v2322 = vsel %vm1449, %v2290, %v2165
      %v2323 = vsel %vm1449, %v2291, %v2167
      %v2324 = vsel %vm1449, %v2292, %v2169
      %v2325 = vsel %vm1449, %v2293, %v2171
      %v2326 = vsel %vm1449, %v2294, %v2173
      %v2327 = vsel %vm1449, %v2295, %v2175
      %v2328 = vsel %vm1449, %v2296, %v2177
      %v2329 = vsel %vm1449, %v2297, %v2179
      %v2330 = vsel %vm1449, %v2298, %v2181
      %v2331 = vsel %vm1449, %v2299, %v2183
      %v2332 = vsel %vm1449, %v2300, %v2185
      %v2333 = vsel %vm1449, %v2301, %v2187
      %v2334 = vsel %vm1449, %v2302, %v2189
      %v2335 = vsel %vm1449, %v2303, %v2191
      %v2336 = vsel %vm1449, %v2304, %v2193
      %v2337 = vsel %vm1449, %v2305, %v2195
      %v2338 = vsel %vm1449, %v2306, %v2197
      %v2339 = vsel %vm1449, %v2307, %v2199
      %v2340 = vsel %vm1449, %v2308, %v2201
      %v2341 = vsel %vm1449, %v2309, %v2203
      %v2342 = vsel %vm1449, %v2310, %v2205
      %v2343 = vsel %vm1449, %v2311, %v2207
      %v2344 = vsel %vm1449, %v2312, %v2209
      %v2345 = vsel %vm1449, %v2313, %v2211
      %v2346 = vsel %vm1449, %v2314, %v2213
      %v2347 = vsel %vm1449, %v2315, %v2215
      %v2348 = vsel %vm1449, %v2316, %v2217
      %v2349 = vsel %vm1449, %v2317, %v2219
      %v2350 = vsel %vm1449, %v2318, %v2221
      %v2351 = vsel %vm1449, %v2319, %v2223
      %v2352 = vpack.c.bf16 %v2321, %v2320
      %v2353 = vpack.c.bf16 %v2323, %v2322
      %v2354 = vpack.c.bf16 %v2325, %v2324
      %v2355 = vpack.c.bf16 %v2327, %v2326
      %v2356 = vpack.c.bf16 %v2329, %v2328
      %v2357 = vpack.c.bf16 %v2331, %v2330
      %v2358 = vpack.c.bf16 %v2333, %v2332
      %v2359 = vpack.c.bf16 %v2335, %v2334
      %v2360 = vpack.c.bf16 %v2337, %v2336
      %v2361 = vpack.c.bf16 %v2339, %v2338
      %v2362 = vpack.c.bf16 %v2341, %v2340
      %v2363 = vpack.c.bf16 %v2343, %v2342
      %v2364 = vpack.c.bf16 %v2345, %v2344
      %v2365 = vpack.c.bf16 %v2347, %v2346
      %v2366 = vpack.c.bf16 %v2349, %v2348
      %v2367 = vpack.c.bf16 %v2351, %v2350
      %v2368 = vld [vmem:[%s3] sm:$0xf]
      %v2369 = vld [vmem:[%s3 + $0x4] sm:$0xf]
      %v2370 = vld [vmem:[%s3 + $0x8] sm:$0xf]
      %v2371 = vld [vmem:[%s3 + $0xc] sm:$0xf]
      %v2372 = vld [vmem:[%s4] sm:$0x1]
      %v2374 = vlaneseq
      %v2375 = vshrl.u32 %v2374, 7
      %v2376 = vsub.s32 0, %v2375
      %v2377 = vrot.slane %v2372, %v2376
      %v2383 = vunpack.c.l.b16 %v2368
      %v2384 = vunpack.c.l.b16 %v2369
      %v2385 = vunpack.c.l.b16 %v2370
      %v2386 = vunpack.c.l.b16 %v2371
      %v2387 = vpack.c.b16 %v2384, %v2383
      %v2388 = vpack.c.b16 %v2386, %v2385
      %v2392 = vsel %vm1515, %v2352, 0
      %v2395 = vsel %vm1515, %v2353, 0
      %v2398 = vsel %vm1515, %v2354, 0
      %v2401 = vsel %vm1515, %v2355, 0
      %v2404 = vsel %vm1515, %v2356, 0
      %v2407 = vsel %vm1515, %v2357, 0
      %v2410 = vsel %vm1515, %v2358, 0
      %v2413 = vsel %vm1515, %v2359, 0
      %v2416 = vsel %vm1515, %v2360, 0
      %v2419 = vsel %vm1515, %v2361, 0
      %v2422 = vsel %vm1515, %v2362, 0
      %v2425 = vsel %vm1515, %v2363, 0
      %v2428 = vsel %vm1515, %v2364, 0
      %v2431 = vsel %vm1515, %v2365, 0
      %v2434 = vsel %vm1515, %v2366, 0
      %v2437 = vsel %vm1515, %v2367, 0
      %2439 = vmatprep.subr.bf16.mxu0 0
      %2440 = vmatpush1.bf16.msra.mxu0 %v2387
      %2441 = vmatprep.subr.bf16.mxu0 0
      %2442 = vmatpush1.bf16.msra.mxu0 %v2388
      %2443 = vmatprep.subr.bf16.mxu0 0
      %2444 = vmatpush1.bf16.msra.mxu0 0
      %2445 = vmatprep.subr.bf16.mxu0 0
      %2446 = vmatpush1.bf16.msra.mxu0 0
      %2447 = vmatprep.subr.bf16.mxu0 0
      %2448 = vmatpush1.bf16.msra.mxu0 0
      %2449 = vmatprep.subr.bf16.mxu0 0
      %2450 = vmatpush1.bf16.msra.mxu0 0
      %2451 = vmatprep.subr.bf16.mxu0 0
      %2452 = vmatpush1.bf16.msra.mxu0 0
      %2453 = vmatprep.subr.bf16.mxu0 0
      %2454 = vmatpush1.bf16.msra.mxu0 0
      %2455 = vmatprep.subr.bf16.mxu0 0
      %2456 = vmatpush1.bf16.msra.mxu0 0
      %2457 = vmatprep.subr.bf16.mxu0 0
      %2458 = vmatpush1.bf16.msra.mxu0 0
      %2459 = vmatprep.subr.bf16.mxu0 0
      %2460 = vmatpush1.bf16.msra.mxu0 0
      %2461 = vmatprep.subr.bf16.mxu0 0
      %2462 = vmatpush1.bf16.msra.mxu0 0
      %2463 = vmatprep.subr.bf16.mxu0 0
      %2464 = vmatpush1.bf16.msra.mxu0 0
      %2465 = vmatprep.subr.bf16.mxu0 0
      %2466 = vmatpush1.bf16.msra.mxu0 0
      %2467 = vmatprep.subr.bf16.mxu0 0
      %2468 = vmatpush1.bf16.msra.mxu0 0
      %2469 = vmatprep.subr.bf16.mxu0 0
      %2470 = vmatpush1.bf16.msra.mxu0 0
      %2471 = vmatprep.mubr.bf16.mxu0 0
      %2472 = vmatmul.mubr.bf16.gmra.mrb[0].mxu0 %v2392
      %v2473 = vpop.f32.mrb[0].mxu0
      %v2474 = vadd.f32 %v2377, %v2473
      %v2475 = vpop.f32.mrb[0].mxu0
      %v2476 = vpop.f32.mrb[0].mxu0
      %v2477 = vadd.f32 %v2377, %v2476
      %v2478 = vpop.f32.mrb[0].mxu0
      %2479 = vmatprep.mubr.bf16.mxu0 0
      %2480 = vmatmul.mubr.bf16.gmra.mrb[0].mxu0 %v2395
      %v2481 = vpop.f32.mrb[0].mxu0
      %v2482 = vadd.f32 %v2377, %v2481
      %v2483 = vpop.f32.mrb[0].mxu0
      %v2484 = vpop.f32.mrb[0].mxu0
      %v2485 = vadd.f32 %v2377, %v2484
      %v2486 = vpop.f32.mrb[0].mxu0
      %2487 = vmatprep.mubr.bf16.mxu0 0
      %2488 = vmatmul.mubr.bf16.gmra.mrb[0].mxu0 %v2398
      %v2489 = vpop.f32.mrb[0].mxu0
      %v2490 = vadd.f32 %v2377, %v2489
      %v2491 = vpop.f32.mrb[0].mxu0
      %v2492 = vpop.f32.mrb[0].mxu0
      %v2493 = vadd.f32 %v2377, %v2492
      %v2494 = vpop.f32.mrb[0].mxu0
      %2495 = vmatprep.mubr.bf16.mxu0 0
      %2496 = vmatmul.mubr.bf16.gmra.mrb[0].mxu0 %v2401
      %v2497 = vpop.f32.mrb[0].mxu0
      %v2498 = vadd.f32 %v2377, %v2497
      %v2499 = vpop.f32.mrb[0].mxu0
      %v2500 = vpop.f32.mrb[0].mxu0
      %v2501 = vadd.f32 %v2377, %v2500
      %v2502 = vpop.f32.mrb[0].mxu0
      %2503 = vmatprep.mubr.bf16.mxu0 0
      %2504 = vmatmul.mubr.bf16.gmra.mrb[0].mxu0 %v2404
      %v2505 = vpop.f32.mrb[0].mxu0
      %v2506 = vadd.f32 %v2377, %v2505
      %v2507 = vpop.f32.mrb[0].mxu0
      %v2508 = vpop.f32.mrb[0].mxu0
      %v2509 = vadd.f32 %v2377, %v2508
      %v2510 = vpop.f32.mrb[0].mxu0
      %2511 = vmatprep.mubr.bf16.mxu0 0
      %2512 = vmatmul.mubr.bf16.gmra.mrb[0].mxu0 %v2407
      %v2513 = vpop.f32.mrb[0].mxu0
      %v2514 = vadd.f32 %v2377, %v2513
      %v2515 = vpop.f32.mrb[0].mxu0
      %v2516 = vpop.f32.mrb[0].mxu0
      %v2517 = vadd.f32 %v2377, %v2516
      %v2518 = vpop.f32.mrb[0].mxu0
      %2519 = vmatprep.mubr.bf16.mxu0 0
      %2520 = vmatmul.mubr.bf16.gmra.mrb[0].mxu0 %v2410
      %v2521 = vpop.f32.mrb[0].mxu0
      %v2522 = vadd.f32 %v2377, %v2521
      %v2523 = vpop.f32.mrb[0].mxu0
      %v2524 = vpop.f32.mrb[0].mxu0
      %v2525 = vadd.f32 %v2377, %v2524
      %v2526 = vpop.f32.mrb[0].mxu0
      %2527 = vmatprep.mubr.bf16.mxu0 0
      %2528 = vmatmul.mubr.bf16.gmra.mrb[0].mxu0 %v2413
      %v2529 = vpop.f32.mrb[0].mxu0
      %v2530 = vadd.f32 %v2377, %v2529
      %v2531 = vpop.f32.mrb[0].mxu0
      %v2532 = vpop.f32.mrb[0].mxu0
      %v2533 = vadd.f32 %v2377, %v2532
      %v2534 = vpop.f32.mrb[0].mxu0
      %2535 = vmatprep.mubr.bf16.mxu0 0
      %2536 = vmatmul.mubr.bf16.gmra.mrb[0].mxu0 %v2416
      %v2537 = vpop.f32.mrb[0].mxu0
      %v2538 = vadd.f32 %v2377, %v2537
      %v2539 = vpop.f32.mrb[0].mxu0
      %v2540 = vpop.f32.mrb[0].mxu0
      %v2541 = vadd.f32 %v2377, %v2540
      %v2542 = vpop.f32.mrb[0].mxu0
      %2543 = vmatprep.mubr.bf16.mxu0 0
      %2544 = vmatmul.mubr.bf16.gmra.mrb[0].mxu0 %v2419
      %v2545 = vpop.f32.mrb[0].mxu0
      %v2546 = vadd.f32 %v2377, %v2545
      %v2547 = vpop.f32.mrb[0].mxu0
      %v2548 = vpop.f32.mrb[0].mxu0
      %v2549 = vadd.f32 %v2377, %v2548
      %v2550 = vpop.f32.mrb[0].mxu0
      %2551 = vmatprep.mubr.bf16.mxu0 0
      %2552 = vmatmul.mubr.bf16.gmra.mrb[0].mxu0 %v2422
      %v2553 = vpop.f32.mrb[0].mxu0
      %v2554 = vadd.f32 %v2377, %v2553
      %v2555 = vpop.f32.mrb[0].mxu0
      %v2556 = vpop.f32.mrb[0].mxu0
      %v2557 = vadd.f32 %v2377, %v2556
      %v2558 = vpop.f32.mrb[0].mxu0
      %2559 = vmatprep.mubr.bf16.mxu0 0
      %2560 = vmatmul.mubr.bf16.gmra.mrb[0].mxu0 %v2425
      %v2561 = vpop.f32.mrb[0].mxu0
      %v2562 = vadd.f32 %v2377, %v2561
      %v2563 = vpop.f32.mrb[0].mxu0
      %v2564 = vpop.f32.mrb[0].mxu0
      %v2565 = vadd.f32 %v2377, %v2564
      %v2566 = vpop.f32.mrb[0].mxu0
      %2567 = vmatprep.mubr.bf16.mxu0 0
      %2568 = vmatmul.mubr.bf16.gmra.mrb[0].mxu0 %v2428
      %v2569 = vpop.f32.mrb[0].mxu0
      %v2570 = vadd.f32 %v2377, %v2569
      %v2571 = vpop.f32.mrb[0].mxu0
      %v2572 = vpop.f32.mrb[0].mxu0
      %v2573 = vadd.f32 %v2377, %v2572
      %v2574 = vpop.f32.mrb[0].mxu0
      %2575 = vmatprep.mubr.bf16.mxu0 0
      %2576 = vmatmul.mubr.bf16.gmra.mrb[0].mxu0 %v2431
      %v2577 = vpop.f32.mrb[0].mxu0
      %v2578 = vadd.f32 %v2377, %v2577
      %v2579 = vpop.f32.mrb[0].mxu0
      %v2580 = vpop.f32.mrb[0].mxu0
      %v2581 = vadd.f32 %v2377, %v2580
      %v2582 = vpop.f32.mrb[0].mxu0
      %2583 = vmatprep.mubr.bf16.mxu0 0
      %2584 = vmatmul.mubr.bf16.gmra.mrb[0].mxu0 %v2434
      %v2585 = vpop.f32.mrb[0].mxu0
      %v2586 = vadd.f32 %v2377, %v2585
      %v2587 = vpop.f32.mrb[0].mxu0
      %v2588 = vpop.f32.mrb[0].mxu0
      %v2589 = vadd.f32 %v2377, %v2588
      %v2590 = vpop.f32.mrb[0].mxu0
      %2591 = vmatprep.mubr.bf16.mxu0 0
      %2592 = vmatmul.mubr.bf16.gmra.mrb[0].mxu0 %v2437
      %v2593 = vpop.f32.mrb[0].mxu0
      %v2594 = vadd.f32 %v2377, %v2593
      %v2595 = vpop.f32.mrb[0].mxu0
      %v2596 = vpop.f32.mrb[0].mxu0
      %v2597 = vadd.f32 %v2377, %v2596
      %v2598 = vpop.f32.mrb[0].mxu0
      %2599 = vdwg.mxu0
      %v2600 = vmax.f32 %v2474, 0.0
      %v2601 = vmax.f32 %v2477, 0.0
      %v2602 = vmax.f32 %v2482, 0.0
      %v2603 = vmax.f32 %v2485, 0.0
      %v2604 = vmax.f32 %v2490, 0.0
      %v2605 = vmax.f32 %v2493, 0.0
      %v2606 = vmax.f32 %v2498, 0.0
      %v2607 = vmax.f32 %v2501, 0.0
      %v2608 = vmax.f32 %v2506, 0.0
      %v2609 = vmax.f32 %v2509, 0.0
      %v2610 = vmax.f32 %v2514, 0.0
      %v2611 = vmax.f32 %v2517, 0.0
      %v2612 = vmax.f32 %v2522, 0.0
      %v2613 = vmax.f32 %v2525, 0.0
      %v2614 = vmax.f32 %v2530, 0.0
      %v2615 = vmax.f32 %v2533, 0.0
      %v2616 = vmax.f32 %v2538, 0.0
      %v2617 = vmax.f32 %v2541, 0.0
      %v2618 = vmax.f32 %v2546, 0.0
      %v2619 = vmax.f32 %v2549, 0.0
      %v2620 = vmax.f32 %v2554, 0.0
      %v2621 = vmax.f32 %v2557, 0.0
      %v2622 = vmax.f32 %v2562, 0.0
      %v2623 = vmax.f32 %v2565, 0.0
      %v2624 = vmax.f32 %v2570, 0.0
      %v2625 = vmax.f32 %v2573, 0.0
      %v2626 = vmax.f32 %v2578, 0.0
      %v2627 = vmax.f32 %v2581, 0.0
      %v2628 = vmax.f32 %v2586, 0.0
      %v2629 = vmax.f32 %v2589, 0.0
      %v2630 = vmax.f32 %v2594, 0.0
      %v2631 = vmax.f32 %v2597, 0.0
      %2632 = vst.msk [vmem:[%s224] sm:$0xff] %vm1317, %v2600
      %2633 = vst.msk [vmem:[%s224 + $0x8] sm:$0xff] %vm1317, %v2601
      %2634 = vst.msk [vmem:[%s224 + $0x20] sm:$0xff] %vm1317, %v2602
      %2635 = vst.msk [vmem:[%s224 + $0x28] sm:$0xff] %vm1317, %v2603
      %2636 = vst.msk [vmem:[%s224 + $0x40] sm:$0xff] %vm1317, %v2604
      %2637 = vst.msk [vmem:[%s224 + $0x48] sm:$0xff] %vm1317, %v2605
      %2638 = vst.msk [vmem:[%s224 + $0x60] sm:$0xff] %vm1317, %v2606
      %2639 = vst.msk [vmem:[%s224 + $0x68] sm:$0xff] %vm1317, %v2607
      %2640 = vst.msk [vmem:[%s224 + $0x80] sm:$0xff] %vm1317, %v2608
      %2641 = vst.msk [vmem:[%s224 + $0x88] sm:$0xff] %vm1317, %v2609
      %2642 = vst.msk [vmem:[%s224 + $0xa0] sm:$0xff] %vm1317, %v2610
      %2643 = vst.msk [vmem:[%s224 + $0xa8] sm:$0xff] %vm1317, %v2611
      %2644 = vst.msk [vmem:[%s224 + $0xc0] sm:$0xff] %vm1317, %v2612
      %2645 = vst.msk [vmem:[%s224 + $0xc8] sm:$0xff] %vm1317, %v2613
      %2646 = vst.msk [vmem:[%s224 + $0xe0] sm:$0xff] %vm1317, %v2614
      %2647 = vst.msk [vmem:[%s224 + $0xe8] sm:$0xff] %vm1317, %v2615
      %2648 = vst.msk [vmem:[%s224 + $0x100] sm:$0xff] %vm1317, %v2616
      %2649 = vst.msk [vmem:[%s224 + $0x108] sm:$0xff] %vm1317, %v2617
      %2650 = vst.msk [vmem:[%s224 + $0x120] sm:$0xff] %vm1317, %v2618
      %2651 = vst.msk [vmem:[%s224 + $0x128] sm:$0xff] %vm1317, %v2619
      %2652 = vst.msk [vmem:[%s224 + $0x140] sm:$0xff] %vm1317, %v2620
      %2653 = vst.msk [vmem:[%s224 + $0x148] sm:$0xff] %vm1317, %v2621
      %2654 = vst.msk [vmem:[%s224 + $0x160] sm:$0xff] %vm1317, %v2622
      %2655 = vst.msk [vmem:[%s224 + $0x168] sm:$0xff] %vm1317, %v2623
      %2656 = vst.msk [vmem:[%s224 + $0x180] sm:$0xff] %vm1317, %v2624
      %2657 = vst.msk [vmem:[%s224 + $0x188] sm:$0xff] %vm1317, %v2625
      %2658 = vst.msk [vmem:[%s224 + $0x1a0] sm:$0xff] %vm1317, %v2626
      %2659 = vst.msk [vmem:[%s224 + $0x1a8] sm:$0xff] %vm1317, %v2627
      %2660 = vst.msk [vmem:[%s224 + $0x1c0] sm:$0xff] %vm1317, %v2628
      %2661 = vst.msk [vmem:[%s224 + $0x1c8] sm:$0xff] %vm1317, %v2629
      %2662 = vst.msk [vmem:[%s224 + $0x1e0] sm:$0xff] %vm1317, %v2630
      %2663 = vst.msk [vmem:[%s224 + $0x1e8] sm:$0xff] %vm1317, %v2631
      %2696 = vrot.lane.b32.xlu0 %v2600, 120
      %v2697 = vpop.permute.xlu0 %2696
      %2698 = vrot.lane.b32.xlu0 %v2601, 120
      %v2699 = vpop.permute.xlu0 %2698
      %2700 = vrot.lane.b32.xlu0 %v2602, 120
      %v2701 = vpop.permute.xlu0 %2700
      %2702 = vrot.lane.b32.xlu0 %v2603, 120
      %v2703 = vpop.permute.xlu0 %2702
      %2704 = vrot.lane.b32.xlu0 %v2604, 120
      %v2705 = vpop.permute.xlu0 %2704
      %2706 = vrot.lane.b32.xlu0 %v2605, 120
      %v2707 = vpop.permute.xlu0 %2706
      %2708 = vrot.lane.b32.xlu0 %v2606, 120
      %v2709 = vpop.permute.xlu0 %2708
      %2710 = vrot.lane.b32.xlu0 %v2607, 120
      %v2711 = vpop.permute.xlu0 %2710
      %2712 = vrot.lane.b32.xlu0 %v2608, 120
      %v2713 = vpop.permute.xlu0 %2712
      %2714 = vrot.lane.b32.xlu0 %v2609, 120
      %v2715 = vpop.permute.xlu0 %2714
      %2716 = vrot.lane.b32.xlu0 %v2610, 120
      %v2717 = vpop.permute.xlu0 %2716
      %2718 = vrot.lane.b32.xlu0 %v2611, 120
      %v2719 = vpop.permute.xlu0 %2718
      %2720 = vrot.lane.b32.xlu0 %v2612, 120
      %v2721 = vpop.permute.xlu0 %2720
      %2722 = vrot.lane.b32.xlu0 %v2613, 120
      %v2723 = vpop.permute.xlu0 %2722
      %2724 = vrot.lane.b32.xlu0 %v2614, 120
      %v2725 = vpop.permute.xlu0 %2724
      %2726 = vrot.lane.b32.xlu0 %v2615, 120
      %v2727 = vpop.permute.xlu0 %2726
      %2728 = vrot.lane.b32.xlu0 %v2616, 120
      %v2729 = vpop.permute.xlu0 %2728
      %2730 = vrot.lane.b32.xlu0 %v2617, 120
      %v2731 = vpop.permute.xlu0 %2730
      %2732 = vrot.lane.b32.xlu0 %v2618, 120
      %v2733 = vpop.permute.xlu0 %2732
      %2734 = vrot.lane.b32.xlu0 %v2619, 120
      %v2735 = vpop.permute.xlu0 %2734
      %2736 = vrot.lane.b32.xlu0 %v2620, 120
      %v2737 = vpop.permute.xlu0 %2736
      %2738 = vrot.lane.b32.xlu0 %v2621, 120
      %v2739 = vpop.permute.xlu0 %2738
      %2740 = vrot.lane.b32.xlu0 %v2622, 120
      %v2741 = vpop.permute.xlu0 %2740
      %2742 = vrot.lane.b32.xlu0 %v2623, 120
      %v2743 = vpop.permute.xlu0 %2742
      %2744 = vrot.lane.b32.xlu0 %v2624, 120
      %v2745 = vpop.permute.xlu0 %2744
      %2746 = vrot.lane.b32.xlu0 %v2625, 120
      %v2747 = vpop.permute.xlu0 %2746
      %2748 = vrot.lane.b32.xlu0 %v2626, 120
      %v2749 = vpop.permute.xlu0 %2748
      %2750 = vrot.lane.b32.xlu0 %v2627, 120
      %v2751 = vpop.permute.xlu0 %2750
      %2752 = vrot.lane.b32.xlu0 %v2628, 120
      %v2753 = vpop.permute.xlu0 %2752
      %2754 = vrot.lane.b32.xlu0 %v2629, 120
      %v2755 = vpop.permute.xlu0 %2754
      %2756 = vrot.lane.b32.xlu0 %v2630, 120
      %v2757 = vpop.permute.xlu0 %2756
      %2758 = vrot.lane.b32.xlu0 %v2631, 120
      %v2759 = vpop.permute.xlu0 %2758
      %s2792 = scalar_lea.vmem %s224, 16
      %2793 = vst.msk [vmem:[%s2792] sm:$0xff] %vm1317, %v2697
      %2794 = vst.msk [vmem:[%s2792 + $0x8] sm:$0xff] %vm1317, %v2699
      %2795 = vst.msk [vmem:[%s2792 + $0x20] sm:$0xff] %vm1317, %v2701
      %2796 = vst.msk [vmem:[%s2792 + $0x28] sm:$0xff] %vm1317, %v2703
      %2797 = vst.msk [vmem:[%s2792 + $0x40] sm:$0xff] %vm1317, %v2705
      %2798 = vst.msk [vmem:[%s2792 + $0x48] sm:$0xff] %vm1317, %v2707
      %2799 = vst.msk [vmem:[%s2792 + $0x60] sm:$0xff] %vm1317, %v2709
      %2800 = vst.msk [vmem:[%s2792 + $0x68] sm:$0xff] %vm1317, %v2711
      %2801 = vst.msk [vmem:[%s2792 + $0x80] sm:$0xff] %vm1317, %v2713
      %2802 = vst.msk [vmem:[%s2792 + $0x88] sm:$0xff] %vm1317, %v2715
      %2803 = vst.msk [vmem:[%s2792 + $0xa0] sm:$0xff] %vm1317, %v2717
      %2804 = vst.msk [vmem:[%s2792 + $0xa8] sm:$0xff] %vm1317, %v2719
      %2805 = vst.msk [vmem:[%s2792 + $0xc0] sm:$0xff] %vm1317, %v2721
      %2806 = vst.msk [vmem:[%s2792 + $0xc8] sm:$0xff] %vm1317, %v2723
      %2807 = vst.msk [vmem:[%s2792 + $0xe0] sm:$0xff] %vm1317, %v2725
      %2808 = vst.msk [vmem:[%s2792 + $0xe8] sm:$0xff] %vm1317, %v2727
      %2809 = vst.msk [vmem:[%s2792 + $0x100] sm:$0xff] %vm1317, %v2729
      %2810 = vst.msk [vmem:[%s2792 + $0x108] sm:$0xff] %vm1317, %v2731
      %2811 = vst.msk [vmem:[%s2792 + $0x120] sm:$0xff] %vm1317, %v2733
      %2812 = vst.msk [vmem:[%s2792 + $0x128] sm:$0xff] %vm1317, %v2735
      %2813 = vst.msk [vmem:[%s2792 + $0x140] sm:$0xff] %vm1317, %v2737
      %2814 = vst.msk [vmem:[%s2792 + $0x148] sm:$0xff] %vm1317, %v2739
      %2815 = vst.msk [vmem:[%s2792 + $0x160] sm:$0xff] %vm1317, %v2741
      %2816 = vst.msk [vmem:[%s2792 + $0x168] sm:$0xff] %vm1317, %v2743
      %2817 = vst.msk [vmem:[%s2792 + $0x180] sm:$0xff] %vm1317, %v2745
      %2818 = vst.msk [vmem:[%s2792 + $0x188] sm:$0xff] %vm1317, %v2747
      %2819 = vst.msk [vmem:[%s2792 + $0x1a0] sm:$0xff] %vm1317, %v2749
      %2820 = vst.msk [vmem:[%s2792 + $0x1a8] sm:$0xff] %vm1317, %v2751
      %2821 = vst.msk [vmem:[%s2792 + $0x1c0] sm:$0xff] %vm1317, %v2753
      %2822 = vst.msk [vmem:[%s2792 + $0x1c8] sm:$0xff] %vm1317, %v2755
      %2823 = vst.msk [vmem:[%s2792 + $0x1e0] sm:$0xff] %vm1317, %v2757
      %2824 = vst.msk [vmem:[%s2792 + $0x1e8] sm:$0xff] %vm1317, %v2759
      %p2825 = scmp.lt.s32.totalorder %s16, 1
      %s2826 = scalar_select %p2825, %s16, 1
      %s2827 = smul.addr %s2826, 64
      %s2828 = smul.addr %s2827, 8
      %s2829 = scalar_lea.vmem %s5, %s2828
      // Predicated region
      $region41: #{tpu_custom_call.1} parent=39 // pred_check
        %p2830 = pneg %p144
      $region42: #{tpu_custom_call.1} parent=39 // pred_check_branch
        %2832 = sbr.rel (%p2830) target = $region44
      $region43: #{tpu_custom_call.1} parent=39 // pred_region
        _
      $region44: #{tpu_custom_call.1} parent=39 // pred_fallthru
        _
    $region40: #{tpu_custom_call.1} parent=5 // pred_fallthru
      _
    %p2833 = scmp.le.s32.totalorder 2, %s11
    // Predicated region
    $region45: #{tpu_custom_call.1} parent=5 // pred_check
      %p2834 = pneg %p2833
    $region46: #{tpu_custom_call.1} parent=5 // pred_check_branch
      %2836 = sbr.rel (%p2834) target = $region48
    $region47: #{tpu_custom_call.1} parent=5 // pred_region
      %s2837 = ssub.s32 %s11, 2
      // Predicated region
      $region49: #{tpu_custom_call.1} parent=47 // pred_check
        %p2838 = pneg %p150
      $region50: #{tpu_custom_call.1} parent=47 // pred_check_branch
        %2840 = sbr.rel (%p2838) target = $region52
      $region51: #{tpu_custom_call.1} parent=47 // pred_region
        %p2841 = scmp.lt.s32.totalorder %s17, 1
        %s2842 = scalar_select %p2841, %s17, 1
        %s2843 = smul.addr %s2842, 64
        %s2844 = smul.addr %s2843, 8
        %s2845 = scalar_lea.vmem %s5, %s2844
      $region52: #{tpu_custom_call.1} parent=47 // pred_fallthru
        _
    $region48: #{tpu_custom_call.1} parent=5 // pred_fallthru
      _
  $region6: #{tpu_custom_call.1} parent=0 // loop_footer
    %s15 = sadd.s32 1, %s11
  $region7: #{tpu_custom_call.1} parent=0 // loop_footer_branch
    %10 = sbr.rel target = $region3
  $region8: #{tpu_custom_call.1} parent=0 // loop_exit
    _

</llo_original>
